<compile_context>
chip_gen: v5e
topology: v5e:2x2
jax: 0.10.0
libtpu: 0.0.40
codegen_flags: <defaults>
</compile_context>

<pallas_src>
import functools

import jax
import jax.numpy as jnp
from jax import lax
from jax.experimental import pallas as pl
from jax.experimental.pallas import tpu as pltpu


# ----------------------------- config -----------------------------
class Config:
    emb_size = 32
    max_norm = 1.0
    num_layers = 1
    rnn_dropout = 0.0   # between-layer LSTM dropout (identity in eval / num_layers=1)
    dropout = 0.0       # nn.Dropout -> identity in eval mode
    nl_seq_len = 8
    path_len = 8
    k = 4


VMEM_SPEC = pl.BlockSpec(memory_space=pltpu.MemorySpace.VMEM)


# ----------------------------- single fused kernel -----------------------------
def embedder_kernel(nl_ids_ref, st_ids_ref, et_ids_ref, path_ids_ref,
                    nl_tab_ref, path_tab_ref, wb_ref, wa_ref, lw_ref, lb_ref,
                    *refs, B, S, k, T, D, num_layers, max_norm):
    # refs = [wih_0, whh_0, b_0, (per extra layer...), nl_out_ref, code_out_ref]
    lstm_refs = refs[:3 * num_layers]
    nl_out_ref, code_out_ref = refs[3 * num_layers:]

    N = B * k          # LSTM batch (= number of paths)
    D2 = 2 * D         # both-direction hidden width
    G = 8 * D          # fused gate width: [i | f | o | g], each slab 2D wide

    # --- nn.Embedding with max_norm: renorm the (tiny) tables once, then gather.
    def renorm(tab):
        nrm = jnp.sqrt(jnp.sum(tab * tab, axis=-1, keepdims=True))
        scale = jnp.where(nrm > max_norm, max_norm / (nrm + 1e-7), 1.0)
        return tab * scale

    # Gather = one-hot @ table (deterministic MXU path; vocab is ~50-60 rows).
    def gather(ids_ref, tab):
        n = ids_ref.shape[0]
        v = tab.shape[0]
        onehot = jnp.where(
            ids_ref[...] == lax.broadcasted_iota(jnp.int32, (n, v), 1), 1.0, 0.0)
        return jnp.dot(onehot, tab, preferred_element_type=jnp.float32)

    nl_tab = renorm(nl_tab_ref[...])
    path_tab = renorm(path_tab_ref[...])

    nl_e = gather(nl_ids_ref, nl_tab)                                     # (B*S, D)
    st_sum = gather(st_ids_ref, nl_tab).reshape(N, S, D).sum(axis=1)      # (N, D)
    et_sum = gather(et_ids_ref, nl_tab).reshape(N, S, D).sum(axis=1)      # (N, D)
    # path ids arrive time-major: row = t*N + n  -> per-step slab is a static
    # 8-sublane-aligned slice.
    x = gather(path_ids_ref, path_tab)                                    # (T*N, D)

    # --- precomputed (hoisted) lane masks for gate assembly / nonlinearity split
    col = lax.broadcasted_iota(jnp.int32, (N, G), 1)
    fwd_mask = (col % D2) < D                       # fwd-direction columns of each slab
    half_col = lax.broadcasted_iota(jnp.int32, (N, 4 * D), 1)
    og_tanh_mask = half_col >= D2                   # within [o | g] half: the g columns

    # --- fused bidirectional LSTM (eval mode), num_layers static Python loop
    path_vec = None
    for layer in range(num_layers):
        wih = lstm_refs[3 * layer][...]             # (din, 8D)
        whh = lstm_refs[3 * layer + 1][...]         # (2D, 8D), block structure
        b = lstm_refs[3 * layer + 2][...]           # (1, 8D)

        # Hoisted input projection: one matmul for all steps & both directions.
        gx = jnp.dot(x, wih, preferred_element_type=jnp.float32) + b      # (T*N, 8D)

        h = jnp.zeros((N, D2), jnp.float32)
        c = jnp.zeros((N, D2), jnp.float32)
        need_seq = layer + 1 < num_layers
        h_list = []

        # TODO(synk): keeping whh resident in the MXU via pltpu.matmul_push_rhs /
        # matmul_acc_lhs would shave per-step latency further; jnp.dot kept for
        # guaranteed lowering.
        for t in range(T):                                                 # static unroll
            gx_t = gx[t * N:(t + 1) * N]                                   # fwd time t
            gx_r = gx[(T - 1 - t) * N:(T - t) * N]                         # bwd time T-1-t
            gates = (jnp.where(fwd_mask, gx_t, gx_r)
                     + jnp.dot(h, whh, preferred_element_type=jnp.float32))  # (N, 8D)
            sig = jax.nn.sigmoid(gates)                                    # full vreg EUP
            og = jnp.where(og_tanh_mask,
                           jnp.tanh(gates[:, 2 * D2:]),                   # lane-aligned half
                           sig[:, 2 * D2:])                               # [o | tanh(g)]
            i_g = sig[:, :D2]
            f_g = sig[:, D2:2 * D2]
            o_g = og[:, :D2]
            g_g = og[:, D2:]
            c = f_g * c + i_g * g_g                                        # (N, 2D)
            h = o_g * jnp.tanh(c)                                          # (N, 2D)
            if need_seq:
                h_list.append(h)

        if need_seq:
            # next layer input at time t = concat(h_fwd[t], h_bwd[t]); the bwd hidden
            # for original time t was produced at step T-1-t.
            xs = [jnp.concatenate([h_list[t][:, :D], h_list[T - 1 - t][:, D:]], axis=1)
                  for t in range(T)]
            x = jnp.concatenate(xs, axis=0)                                # (T*N, 2D)
        path_vec = h                                                       # (N, 2D) [h_fwd_last | h_bwd_last]

    # --- code_emb = [start_sum | end_sum | path_vec]  (N, 4D)
    # TODO(synk): nn.Dropout in train mode not implemented; eval-mode identity applied.
    code_e = jnp.concatenate([st_sum, et_sum, path_vec], axis=1)

    # --- bag attention (per-batch bag of L rows); matmul flattened to 2-D.
    def bag_attention(e2d, w, bags, L, F):
        e3 = e2d.reshape(bags, L, F)
        h0 = jnp.mean(e3, axis=1, keepdims=True)                           # (bags,1,F)
        ha = jnp.dot(e2d, w, preferred_element_type=jnp.float32).reshape(bags, L, F)
        scores = jnp.sum(ha * h0, axis=-1, keepdims=True)                  # (bags,L,1)
        m = jnp.max(scores, axis=1, keepdims=True)
        p = jnp.exp(scores - m)
        a = p * pl.reciprocal(jnp.sum(p, axis=1, keepdims=True), approx=True)
        return jnp.sum(a * e3, axis=1)                                     # (bags,F)

    nl_out_ref[...] = bag_attention(nl_e, wb_ref[...], B, S, D)
    ct = bag_attention(code_e, wa_ref[...], B, k, 4 * D)
    code_out_ref[...] = (jnp.dot(ct, lw_ref[...],
                                 preferred_element_type=jnp.float32) + lb_ref[...])


# ----------------------------- forward wrapper -----------------------------
def embedder_forward(params, cfg, nl, path, start_token, end_token):
    B = nl.shape[0]
    D = cfg.emb_size
    T = cfg.path_len
    S = cfg.nl_seq_len
    k = cfg.k
    N = B * k

    nl_ids = nl.reshape(B * S, 1).astype(jnp.int32)
    st_ids = start_token.reshape(N * S, 1).astype(jnp.int32)
    et_ids = end_token.reshape(N * S, 1).astype(jnp.int32)
    # time-major (t, n) row order so gx[t*N:(t+1)*N] is a contiguous static slab
    path_ids = jnp.transpose(path.reshape(N, T), (1, 0)).reshape(T * N, 1).astype(jnp.int32)

    lstm_flat = []
    for lp in params["lstm"]:
        lstm_flat += [lp["wih"], lp["whh"], lp["b"]]

    kern = functools.partial(
        embedder_kernel, B=B, S=S, k=k, T=T, D=D,
        num_layers=cfg.num_layers, max_norm=cfg.max_norm)

    n_in = 10 + 3 * cfg.num_layers
    nl_vec, code_vec = pl.pallas_call(
        kern,
        out_shape=(jax.ShapeDtypeStruct((B, D), jnp.float32),
                   jax.ShapeDtypeStruct((B, D), jnp.float32)),
        in_specs=[VMEM_SPEC] * n_in,
        out_specs=(VMEM_SPEC, VMEM_SPEC),
    )(nl_ids, st_ids, et_ids, path_ids,
      params["nl_emb"], params["path_emb"],
      params["W_b"], params["W_a"], params["lin_w"], params["lin_b"],
      *lstm_flat)
    return nl_vec, code_vec


# ----------------------------- parameter init -----------------------------
def _xavier_uniform(key, shape):
    fan_out, fan_in = shape
    bound = (6.0 / (fan_in + fan_out)) ** 0.5
    return jax.random.uniform(key, shape, minval=-bound, maxval=bound, dtype=jnp.float32)


def _orthogonal(key, shape):
    # shape = (rows, cols) with rows >= cols for all uses here
    a = jax.random.normal(key, shape, dtype=jnp.float32)
    q, r = jnp.linalg.qr(a)
    q = q * jnp.sign(jnp.diagonal(r))[None, :]
    return q[:, :shape[1]]


def init_params(key, cfg, nl_vocab_len, path_vocab_len):
    D = cfg.emb_size
    keys = jax.random.split(key, 8)

    nl_tab = jax.random.uniform(keys[0], (nl_vocab_len, D), minval=-0.1, maxval=0.1,
                                dtype=jnp.float32).at[0].set(0.0)
    path_tab = jax.random.uniform(keys[1], (path_vocab_len, D), minval=-0.1, maxval=0.1,
                                  dtype=jnp.float32).at[0].set(0.0)

    W_a = _xavier_uniform(keys[2], (4 * D, 4 * D))
    W_b = _xavier_uniform(keys[3], (D, D))

    lin_bound = 1.0 / (4 * D) ** 0.5
    lin_w = jax.random.uniform(keys[4], (4 * D, D), minval=-lin_bound, maxval=lin_bound,
                               dtype=jnp.float32)
    lin_b = jax.random.uniform(keys[5], (1, D), minval=-lin_bound, maxval=lin_bound,
                               dtype=jnp.float32)

    # Fused bidirectional LSTM params.
    #   wih: (din, 8D)  — shared-x layout (x multiplies both directions' gate columns)
    #   whh: (2D, 8D)   — block structure: rows [h_fwd | h_bwd] -> own-direction columns
    #   column layout: [i | f | o | g], each slab 2D wide, fwd cols then bwd cols
    #   (PyTorch per-direction gate order is (i, f, g, o); weights orthogonal,
    #    biases uniform — PyTorch defaults.)
    GATE_PERM = (0, 1, 3, 2)   # fused slot -> PyTorch gate index
    hb = 1.0 / D ** 0.5
    lstm = []
    lkey = keys[6]
    for layer in range(cfg.num_layers):
        din = D if layer == 0 else 2 * D
        wih_big = jnp.zeros((din, 8 * D), jnp.float32)
        whh_big = jnp.zeros((2 * D, 8 * D), jnp.float32)
        b_big = jnp.zeros((8 * D,), jnp.float32)
        for d in range(2):                                   # 0 = fwd, 1 = bwd
            lkey, k1, k2, k3, k4 = jax.random.split(lkey, 5)
            wih = _orthogonal(k1, (4 * D, din)).T            # (din, 4D), pt order i,f,g,o
            whh = _orthogonal(k2, (4 * D, D)).T              # (D, 4D)
            b_ih = jax.random.uniform(k3, (4 * D,), minval=-hb, maxval=hb, dtype=jnp.float32)
            b_hh = jax.random.uniform(k4, (4 * D,), minval=-hb, maxval=hb, dtype=jnp.float32)
            b = b_ih + b_hh
            for gn, gp in enumerate(GATE_PERM):
                col = gn * 2 * D + d * D
                wih_big = wih_big.at[:, col:col + D].set(wih[:, gp * D:(gp + 1) * D])
                whh_big = whh_big.at[d * D:(d + 1) * D, col:col + D].set(
                    whh[:, gp * D:(gp + 1) * D])
                b_big = b_big.at[col:col + D].set(b[gp * D:(gp + 1) * D])
        lstm.append(dict(wih=wih_big, whh=whh_big, b=b_big[None, :]))

    return dict(nl_emb=nl_tab, path_emb=path_tab, W_a=W_a, W_b=W_b,
                lin_w=lin_w, lin_b=lin_b, lstm=lstm)


# ----------------------------- main -----------------------------
if __name__ == "__main__":
    cfg = Config()
    nl_vocab_len, path_vocab_len = 50, 60
    B = 2

    root = jax.random.PRNGKey(0)
    pkey, dkey = jax.random.split(root)
    params = init_params(pkey, cfg, nl_vocab_len, path_vocab_len)

    k1, k2, k3, k4 = jax.random.split(dkey, 4)
    nl = jax.random.randint(k1, (B, cfg.nl_seq_len), 1, nl_vocab_len)
    path = jax.random.randint(k2, (B, cfg.k, cfg.path_len), 1, path_vocab_len)
    start_token = jax.random.randint(k3, (B, cfg.k, cfg.nl_seq_len), 1, nl_vocab_len)
    end_token = jax.random.randint(k4, (B, cfg.k, cfg.nl_seq_len), 1, nl_vocab_len)

    fwd = jax.jit(lambda p, a, b_, c, d: embedder_forward(p, cfg, a, b_, c, d))
    nl_vec, code_vec = fwd(params, nl, path, start_token, end_token)
    jax.block_until_ready((nl_vec, code_vec))

    assert nl_vec.shape == (B, cfg.emb_size) and nl_vec.dtype == jnp.float32
    assert code_vec.shape == (B, cfg.emb_size) and code_vec.dtype == jnp.float32
    print("KERNEL_OK")
</pallas_src>

<mosaic_0001>
module attributes {stable_mosaic.version = 11 : i64} {
  func.func @embedder_kernel(%arg0: memref<16x1xi32, #tpu.memory_space<vmem>>, %arg1: memref<64x1xi32, #tpu.memory_space<vmem>>, %arg2: memref<64x1xi32, #tpu.memory_space<vmem>>, %arg3: memref<64x1xi32, #tpu.memory_space<vmem>>, %arg4: memref<50x32xf32, #tpu.memory_space<vmem>>, %arg5: memref<60x32xf32, #tpu.memory_space<vmem>>, %arg6: memref<32x32xf32, #tpu.memory_space<vmem>>, %arg7: memref<128x128xf32, #tpu.memory_space<vmem>>, %arg8: memref<128x32xf32, #tpu.memory_space<vmem>>, %arg9: memref<1x32xf32, #tpu.memory_space<vmem>>, %arg10: memref<32x256xf32, #tpu.memory_space<vmem>>, %arg11: memref<64x256xf32, #tpu.memory_space<vmem>>, %arg12: memref<1x256xf32, #tpu.memory_space<vmem>>, %arg13: memref<2x32xf32, #tpu.memory_space<vmem>>, %arg14: memref<2x32xf32, #tpu.memory_space<vmem>>) attributes {dimension_semantics = [], scalar_prefetch = 0 : i64, scratch_operands = 0 : i64, tpu.core_type = #tpu.core_type<tc>} {
    %c0 = arith.constant 0 : index
    %c0_0 = arith.constant 0 : index
    %0 = vector.load %arg4[%c0, %c0_0] : memref<50x32xf32, #tpu.memory_space<vmem>>, vector<50x32xf32>
    %1 = arith.mulf %0, %0 : vector<50x32xf32>
    %cst = arith.constant dense<0.000000e+00> : vector<50xf32>
    %2 = vector.multi_reduction <add>, %1, %cst [1] : vector<50x32xf32> to vector<50xf32>
    %3 = vector.shape_cast %2 : vector<50xf32> to vector<50x1xf32>
    %4 = math.sqrt %3 : vector<50x1xf32>
    %cst_1 = arith.constant 1.000000e+00 : f32
    %5 = vector.broadcast %cst_1 : f32 to vector<50x1xf32>
    %6 = arith.cmpf ogt, %4, %5 : vector<50x1xf32>
    %cst_2 = arith.constant 1.000000e-07 : f32
    %7 = vector.broadcast %cst_2 : f32 to vector<50x1xf32>
    %8 = arith.addf %4, %7 : vector<50x1xf32>
    %cst_3 = arith.constant 1.000000e+00 : f32
    %9 = vector.broadcast %cst_3 : f32 to vector<50x1xf32>
    %10 = arith.divf %9, %8 : vector<50x1xf32>
    %cst_4 = arith.constant 1.000000e+00 : f32
    %11 = vector.broadcast %cst_4 : f32 to vector<50x1xf32>
    %12 = arith.select %6, %10, %11 : vector<50x1xi1>, vector<50x1xf32>
    %13 = vector.broadcast %12 : vector<50x1xf32> to vector<50x32xf32>
    %14 = arith.mulf %0, %13 : vector<50x32xf32>
    %c0_5 = arith.constant 0 : index
    %c0_6 = arith.constant 0 : index
    %15 = vector.load %arg5[%c0_5, %c0_6] : memref<60x32xf32, #tpu.memory_space<vmem>>, vector<60x32xf32>
    %16 = arith.mulf %15, %15 : vector<60x32xf32>
    %cst_7 = arith.constant dense<0.000000e+00> : vector<60xf32>
    %17 = vector.multi_reduction <add>, %16, %cst_7 [1] : vector<60x32xf32> to vector<60xf32>
    %18 = vector.shape_cast %17 : vector<60xf32> to vector<60x1xf32>
    %19 = math.sqrt %18 : vector<60x1xf32>
    %cst_8 = arith.constant 1.000000e+00 : f32
    %20 = vector.broadcast %cst_8 : f32 to vector<60x1xf32>
    %21 = arith.cmpf ogt, %19, %20 : vector<60x1xf32>
    %cst_9 = arith.constant 1.000000e-07 : f32
    %22 = vector.broadcast %cst_9 : f32 to vector<60x1xf32>
    %23 = arith.addf %19, %22 : vector<60x1xf32>
    %cst_10 = arith.constant 1.000000e+00 : f32
    %24 = vector.broadcast %cst_10 : f32 to vector<60x1xf32>
    %25 = arith.divf %24, %23 : vector<60x1xf32>
    %cst_11 = arith.constant 1.000000e+00 : f32
    %26 = vector.broadcast %cst_11 : f32 to vector<60x1xf32>
    %27 = arith.select %21, %25, %26 : vector<60x1xi1>, vector<60x1xf32>
    %28 = vector.broadcast %27 : vector<60x1xf32> to vector<60x32xf32>
    %29 = arith.mulf %15, %28 : vector<60x32xf32>
    %c0_12 = arith.constant 0 : index
    %c0_13 = arith.constant 0 : index
    %30 = vector.load %arg0[%c0_12, %c0_13] : memref<16x1xi32, #tpu.memory_space<vmem>>, vector<16x1xi32>
    %31 = tpu.iota {dimensions = array<i32: 1>} : vector<16x50xi32>
    %32 = vector.broadcast %30 : vector<16x1xi32> to vector<16x50xi32>
    %33 = arith.cmpi eq, %32, %31 : vector<16x50xi32>
    %cst_14 = arith.constant 1.000000e+00 : f32
    %cst_15 = arith.constant 0.000000e+00 : f32
    %34 = vector.broadcast %cst_14 : f32 to vector<16x50xf32>
    %35 = vector.broadcast %cst_15 : f32 to vector<16x50xf32>
    %36 = arith.select %33, %34, %35 : vector<16x50xi1>, vector<16x50xf32>
    %cst_16 = arith.constant dense<0.000000e+00> : vector<16x32xf32>
    %37 = tpu.matmul %36, %14, %cst_16 {dimension_numbers = #tpu.dot_dimension_numbers<[1], [0], [0], [1], [0, 0, 1, 1], [], []>} : vector<16x50xf32>, vector<50x32xf32>, vector<16x32xf32> -> vector<16x32xf32>
    %c0_17 = arith.constant 0 : index
    %c0_18 = arith.constant 0 : index
    %38 = vector.load %arg1[%c0_17, %c0_18] : memref<64x1xi32, #tpu.memory_space<vmem>>, vector<64x1xi32>
    %39 = tpu.iota {dimensions = array<i32: 1>} : vector<64x50xi32>
    %40 = vector.broadcast %38 : vector<64x1xi32> to vector<64x50xi32>
    %41 = arith.cmpi eq, %40, %39 : vector<64x50xi32>
    %cst_19 = arith.constant 1.000000e+00 : f32
    %cst_20 = arith.constant 0.000000e+00 : f32
    %42 = vector.broadcast %cst_19 : f32 to vector<64x50xf32>
    %43 = vector.broadcast %cst_20 : f32 to vector<64x50xf32>
    %44 = arith.select %41, %42, %43 : vector<64x50xi1>, vector<64x50xf32>
    %cst_21 = arith.constant dense<0.000000e+00> : vector<64x32xf32>
    %45 = tpu.matmul %44, %14, %cst_21 {dimension_numbers = #tpu.dot_dimension_numbers<[1], [0], [0], [1], [0, 0, 1, 1], [], []>} : vector<64x50xf32>, vector<50x32xf32>, vector<64x32xf32> -> vector<64x32xf32>
    %46 = vector.shape_cast %45 : vector<64x32xf32> to vector<8x8x32xf32>
    %cst_22 = arith.constant dense<0.000000e+00> : vector<8x32xf32>
    %47 = vector.multi_reduction <add>, %46, %cst_22 [1] : vector<8x8x32xf32> to vector<8x32xf32>
    %c0_23 = arith.constant 0 : index
    %c0_24 = arith.constant 0 : index
    %48 = vector.load %arg2[%c0_23, %c0_24] : memref<64x1xi32, #tpu.memory_space<vmem>>, vector<64x1xi32>
    %49 = tpu.iota {dimensions = array<i32: 1>} : vector<64x50xi32>
    %50 = vector.broadcast %48 : vector<64x1xi32> to vector<64x50xi32>
    %51 = arith.cmpi eq, %50, %49 : vector<64x50xi32>
    %cst_25 = arith.constant 1.000000e+00 : f32
    %cst_26 = arith.constant 0.000000e+00 : f32
    %52 = vector.broadcast %cst_25 : f32 to vector<64x50xf32>
    %53 = vector.broadcast %cst_26 : f32 to vector<64x50xf32>
    %54 = arith.select %51, %52, %53 : vector<64x50xi1>, vector<64x50xf32>
    %cst_27 = arith.constant dense<0.000000e+00> : vector<64x32xf32>
    %55 = tpu.matmul %54, %14, %cst_27 {dimension_numbers = #tpu.dot_dimension_numbers<[1], [0], [0], [1], [0, 0, 1, 1], [], []>} : vector<64x50xf32>, vector<50x32xf32>, vector<64x32xf32> -> vector<64x32xf32>
    %56 = vector.shape_cast %55 : vector<64x32xf32> to vector<8x8x32xf32>
    %cst_28 = arith.constant dense<0.000000e+00> : vector<8x32xf32>
    %57 = vector.multi_reduction <add>, %56, %cst_28 [1] : vector<8x8x32xf32> to vector<8x32xf32>
    %c0_29 = arith.constant 0 : index
    %c0_30 = arith.constant 0 : index
    %58 = vector.load %arg3[%c0_29, %c0_30] : memref<64x1xi32, #tpu.memory_space<vmem>>, vector<64x1xi32>
    %59 = tpu.iota {dimensions = array<i32: 1>} : vector<64x60xi32>
    %60 = vector.broadcast %58 : vector<64x1xi32> to vector<64x60xi32>
    %61 = arith.cmpi eq, %60, %59 : vector<64x60xi32>
    %cst_31 = arith.constant 1.000000e+00 : f32
    %cst_32 = arith.constant 0.000000e+00 : f32
    %62 = vector.broadcast %cst_31 : f32 to vector<64x60xf32>
    %63 = vector.broadcast %cst_32 : f32 to vector<64x60xf32>
    %64 = arith.select %61, %62, %63 : vector<64x60xi1>, vector<64x60xf32>
    %cst_33 = arith.constant dense<0.000000e+00> : vector<64x32xf32>
    %65 = tpu.matmul %64, %29, %cst_33 {dimension_numbers = #tpu.dot_dimension_numbers<[1], [0], [0], [1], [0, 0, 1, 1], [], []>} : vector<64x60xf32>, vector<60x32xf32>, vector<64x32xf32> -> vector<64x32xf32>
    %66 = tpu.iota {dimensions = array<i32: 1>} : vector<8x256xi32>
    %c64_i32 = arith.constant 64 : i32
    %c0_i32 = arith.constant 0 : i32
    %67 = arith.cmpi eq, %c64_i32, %c0_i32 : i32
    %c1_i32 = arith.constant 1 : i32
    %68 = arith.select %67, %c1_i32, %c64_i32 : i32
    %69 = vector.broadcast %68 : i32 to vector<8x256xi32>
    %70 = arith.remsi %66, %69 : vector<8x256xi32>
    %c0_i32_34 = arith.constant 0 : i32
    %71 = vector.broadcast %c0_i32_34 : i32 to vector<8x256xi32>
    %72 = arith.cmpi ne, %70, %71 : vector<8x256xi32>
    %c0_i32_35 = arith.constant 0 : i32
    %73 = vector.broadcast %c0_i32_35 : i32 to vector<8x256xi32>
    %74 = arith.cmpi slt, %70, %73 : vector<8x256xi32>
    %c0_i32_36 = arith.constant 0 : i32
    %75 = arith.cmpi slt, %68, %c0_i32_36 : i32
    %76 = vector.broadcast %75 : i1 to vector<8x256xi1>
    %77 = vector.broadcast %76 : vector<8x256xi1> to vector<8x256xi1>
    %78 = arith.xori %74, %77 : vector<8x256xi1>
    %79 = arith.andi %78, %72 : vector<8x256xi1>
    %80 = vector.broadcast %68 : i32 to vector<8x256xi32>
    %81 = arith.addi %70, %80 : vector<8x256xi32>
    %82 = arith.select %79, %81, %70 : vector<8x256xi1>, vector<8x256xi32>
    %c32_i32 = arith.constant 32 : i32
    %83 = vector.broadcast %c32_i32 : i32 to vector<8x256xi32>
    %84 = arith.cmpi slt, %82, %83 : vector<8x256xi32>
    %85 = tpu.iota {dimensions = array<i32: 1>} : vector<8x128xi32>
    %c64_i32_37 = arith.constant 64 : i32
    %86 = vector.broadcast %c64_i32_37 : i32 to vector<8x128xi32>
    %87 = arith.cmpi sge, %85, %86 : vector<8x128xi32>
    %c0_38 = arith.constant 0 : index
    %c0_39 = arith.constant 0 : index
    %88 = vector.load %arg10[%c0_38, %c0_39] : memref<32x256xf32, #tpu.memory_space<vmem>>, vector<32x256xf32>
    %c0_40 = arith.constant 0 : index
    %c0_41 = arith.constant 0 : index
    %89 = vector.load %arg11[%c0_40, %c0_41] : memref<64x256xf32, #tpu.memory_space<vmem>>, vector<64x256xf32>
    %c0_42 = arith.constant 0 : index
    %c0_43 = arith.constant 0 : index
    %90 = vector.load %arg12[%c0_42, %c0_43] : memref<1x256xf32, #tpu.memory_space<vmem>>, vector<1x256xf32>
    %cst_44 = arith.constant dense<0.000000e+00> : vector<64x256xf32>
    %91 = tpu.matmul %65, %88, %cst_44 {dimension_numbers = #tpu.dot_dimension_numbers<[1], [0], [0], [1], [0, 0, 1, 1], [], []>} : vector<64x32xf32>, vector<32x256xf32>, vector<64x256xf32> -> vector<64x256xf32>
    %92 = vector.broadcast %90 : vector<1x256xf32> to vector<64x256xf32>
    %93 = arith.addf %91, %92 : vector<64x256xf32>
    %cst_45 = arith.constant 0.000000e+00 : f32
    %94 = vector.broadcast %cst_45 : f32 to vector<8x64xf32>
    %cst_46 = arith.constant 0.000000e+00 : f32
    %95 = vector.broadcast %cst_46 : f32 to vector<8x64xf32>
    %96 = vector.extract_strided_slice %93 {offsets = [0, 0], sizes = [8, 256], strides = [1, 1]} : vector<64x256xf32> to vector<8x256xf32>
    %97 = vector.extract_strided_slice %93 {offsets = [56, 0], sizes = [8, 256], strides = [1, 1]} : vector<64x256xf32> to vector<8x256xf32>
    %98 = arith.select %84, %96, %97 : vector<8x256xi1>, vector<8x256xf32>
    %cst_47 = arith.constant dense<0.000000e+00> : vector<8x256xf32>
    %99 = tpu.matmul %94, %89, %cst_47 {dimension_numbers = #tpu.dot_dimension_numbers<[1], [0], [0], [1], [0, 0, 1, 1], [], []>} : vector<8x64xf32>, vector<64x256xf32>, vector<8x256xf32> -> vector<8x256xf32>
    %100 = arith.addf %98, %99 : vector<8x256xf32>
    %101 = arith.negf %100 : vector<8x256xf32>
    %102 = math.exp %101 : vector<8x256xf32>
    %cst_48 = arith.constant 1.000000e+00 : f32
    %103 = vector.broadcast %cst_48 : f32 to vector<8x256xf32>
    %104 = arith.addf %103, %102 : vector<8x256xf32>
    %105 = arith.divf %103, %104 : vector<8x256xf32>
    %106 = vector.extract_strided_slice %100 {offsets = [0, 128], sizes = [8, 128], strides = [1, 1]} : vector<8x256xf32> to vector<8x128xf32>
    %107 = math.tanh %106 : vector<8x128xf32>
    %108 = vector.extract_strided_slice %105 {offsets = [0, 128], sizes = [8, 128], strides = [1, 1]} : vector<8x256xf32> to vector<8x128xf32>
    %109 = arith.select %87, %107, %108 : vector<8x128xi1>, vector<8x128xf32>
    %110 = vector.extract_strided_slice %105 {offsets = [0, 0], sizes = [8, 64], strides = [1, 1]} : vector<8x256xf32> to vector<8x64xf32>
    %111 = vector.extract_strided_slice %105 {offsets = [0, 64], sizes = [8, 64], strides = [1, 1]} : vector<8x256xf32> to vector<8x64xf32>
    %112 = vector.extract_strided_slice %109 {offsets = [0, 0], sizes = [8, 64], strides = [1, 1]} : vector<8x128xf32> to vector<8x64xf32>
    %113 = vector.extract_strided_slice %109 {offsets = [0, 64], sizes = [8, 64], strides = [1, 1]} : vector<8x128xf32> to vector<8x64xf32>
    %114 = arith.mulf %111, %95 : vector<8x64xf32>
    %115 = arith.mulf %110, %113 : vector<8x64xf32>
    %116 = arith.addf %114, %115 : vector<8x64xf32>
    %117 = math.tanh %116 : vector<8x64xf32>
    %118 = arith.mulf %112, %117 : vector<8x64xf32>
    %119 = vector.extract_strided_slice %93 {offsets = [8, 0], sizes = [8, 256], strides = [1, 1]} : vector<64x256xf32> to vector<8x256xf32>
    %120 = vector.extract_strided_slice %93 {offsets = [48, 0], sizes = [8, 256], strides = [1, 1]} : vector<64x256xf32> to vector<8x256xf32>
    %121 = arith.select %84, %119, %120 : vector<8x256xi1>, vector<8x256xf32>
    %cst_49 = arith.constant dense<0.000000e+00> : vector<8x256xf32>
    %122 = tpu.matmul %118, %89, %cst_49 {dimension_numbers = #tpu.dot_dimension_numbers<[1], [0], [0], [1], [0, 0, 1, 1], [], []>} : vector<8x64xf32>, vector<64x256xf32>, vector<8x256xf32> -> vector<8x256xf32>
    %123 = arith.addf %121, %122 : vector<8x256xf32>
    %124 = arith.negf %123 : vector<8x256xf32>
    %125 = math.exp %124 : vector<8x256xf32>
    %cst_50 = arith.constant 1.000000e+00 : f32
    %126 = vector.broadcast %cst_50 : f32 to vector<8x256xf32>
    %127 = arith.addf %126, %125 : vector<8x256xf32>
    %128 = arith.divf %126, %127 : vector<8x256xf32>
    %129 = vector.extract_strided_slice %123 {offsets = [0, 128], sizes = [8, 128], strides = [1, 1]} : vector<8x256xf32> to vector<8x128xf32>
    %130 = math.tanh %129 : vector<8x128xf32>
    %131 = vector.extract_strided_slice %128 {offsets = [0, 128], sizes = [8, 128], strides = [1, 1]} : vector<8x256xf32> to vector<8x128xf32>
    %132 = arith.select %87, %130, %131 : vector<8x128xi1>, vector<8x128xf32>
    %133 = vector.extract_strided_slice %128 {offsets = [0, 0], sizes = [8, 64], strides = [1, 1]} : vector<8x256xf32> to vector<8x64xf32>
    %134 = vector.extract_strided_slice %128 {offsets = [0, 64], sizes = [8, 64], strides = [1, 1]} : vector<8x256xf32> to vector<8x64xf32>
    %135 = vector.extract_strided_slice %132 {offsets = [0, 0], sizes = [8, 64], strides = [1, 1]} : vector<8x128xf32> to vector<8x64xf32>
    %136 = vector.extract_strided_slice %132 {offsets = [0, 64], sizes = [8, 64], strides = [1, 1]} : vector<8x128xf32> to vector<8x64xf32>
    %137 = arith.mulf %134, %116 : vector<8x64xf32>
    %138 = arith.mulf %133, %136 : vector<8x64xf32>
    %139 = arith.addf %137, %138 : vector<8x64xf32>
    %140 = math.tanh %139 : vector<8x64xf32>
    %141 = arith.mulf %135, %140 : vector<8x64xf32>
    %142 = vector.extract_strided_slice %93 {offsets = [16, 0], sizes = [8, 256], strides = [1, 1]} : vector<64x256xf32> to vector<8x256xf32>
    %143 = vector.extract_strided_slice %93 {offsets = [40, 0], sizes = [8, 256], strides = [1, 1]} : vector<64x256xf32> to vector<8x256xf32>
    %144 = arith.select %84, %142, %143 : vector<8x256xi1>, vector<8x256xf32>
    %cst_51 = arith.constant dense<0.000000e+00> : vector<8x256xf32>
    %145 = tpu.matmul %141, %89, %cst_51 {dimension_numbers = #tpu.dot_dimension_numbers<[1], [0], [0], [1], [0, 0, 1, 1], [], []>} : vector<8x64xf32>, vector<64x256xf32>, vector<8x256xf32> -> vector<8x256xf32>
    %146 = arith.addf %144, %145 : vector<8x256xf32>
    %147 = arith.negf %146 : vector<8x256xf32>
    %148 = math.exp %147 : vector<8x256xf32>
    %cst_52 = arith.constant 1.000000e+00 : f32
    %149 = vector.broadcast %cst_52 : f32 to vector<8x256xf32>
    %150 = arith.addf %149, %148 : vector<8x256xf32>
    %151 = arith.divf %149, %150 : vector<8x256xf32>
    %152 = vector.extract_strided_slice %146 {offsets = [0, 128], sizes = [8, 128], strides = [1, 1]} : vector<8x256xf32> to vector<8x128xf32>
    %153 = math.tanh %152 : vector<8x128xf32>
    %154 = vector.extract_strided_slice %151 {offsets = [0, 128], sizes = [8, 128], strides = [1, 1]} : vector<8x256xf32> to vector<8x128xf32>
    %155 = arith.select %87, %153, %154 : vector<8x128xi1>, vector<8x128xf32>
    %156 = vector.extract_strided_slice %151 {offsets = [0, 0], sizes = [8, 64], strides = [1, 1]} : vector<8x256xf32> to vector<8x64xf32>
    %157 = vector.extract_strided_slice %151 {offsets = [0, 64], sizes = [8, 64], strides = [1, 1]} : vector<8x256xf32> to vector<8x64xf32>
    %158 = vector.extract_strided_slice %155 {offsets = [0, 0], sizes = [8, 64], strides = [1, 1]} : vector<8x128xf32> to vector<8x64xf32>
    %159 = vector.extract_strided_slice %155 {offsets = [0, 64], sizes = [8, 64], strides = [1, 1]} : vector<8x128xf32> to vector<8x64xf32>
    %160 = arith.mulf %157, %139 : vector<8x64xf32>
    %161 = arith.mulf %156, %159 : vector<8x64xf32>
    %162 = arith.addf %160, %161 : vector<8x64xf32>
    %163 = math.tanh %162 : vector<8x64xf32>
    %164 = arith.mulf %158, %163 : vector<8x64xf32>
    %165 = vector.extract_strided_slice %93 {offsets = [24, 0], sizes = [8, 256], strides = [1, 1]} : vector<64x256xf32> to vector<8x256xf32>
    %166 = vector.extract_strided_slice %93 {offsets = [32, 0], sizes = [8, 256], strides = [1, 1]} : vector<64x256xf32> to vector<8x256xf32>
    %167 = arith.select %84, %165, %166 : vector<8x256xi1>, vector<8x256xf32>
    %cst_53 = arith.constant dense<0.000000e+00> : vector<8x256xf32>
    %168 = tpu.matmul %164, %89, %cst_53 {dimension_numbers = #tpu.dot_dimension_numbers<[1], [0], [0], [1], [0, 0, 1, 1], [], []>} : vector<8x64xf32>, vector<64x256xf32>, vector<8x256xf32> -> vector<8x256xf32>
    %169 = arith.addf %167, %168 : vector<8x256xf32>
    %170 = arith.negf %169 : vector<8x256xf32>
    %171 = math.exp %170 : vector<8x256xf32>
    %cst_54 = arith.constant 1.000000e+00 : f32
    %172 = vector.broadcast %cst_54 : f32 to vector<8x256xf32>
    %173 = arith.addf %172, %171 : vector<8x256xf32>
    %174 = arith.divf %172, %173 : vector<8x256xf32>
    %175 = vector.extract_strided_slice %169 {offsets = [0, 128], sizes = [8, 128], strides = [1, 1]} : vector<8x256xf32> to vector<8x128xf32>
    %176 = math.tanh %175 : vector<8x128xf32>
    %177 = vector.extract_strided_slice %174 {offsets = [0, 128], sizes = [8, 128], strides = [1, 1]} : vector<8x256xf32> to vector<8x128xf32>
    %178 = arith.select %87, %176, %177 : vector<8x128xi1>, vector<8x128xf32>
    %179 = vector.extract_strided_slice %174 {offsets = [0, 0], sizes = [8, 64], strides = [1, 1]} : vector<8x256xf32> to vector<8x64xf32>
    %180 = vector.extract_strided_slice %174 {offsets = [0, 64], sizes = [8, 64], strides = [1, 1]} : vector<8x256xf32> to vector<8x64xf32>
    %181 = vector.extract_strided_slice %178 {offsets = [0, 0], sizes = [8, 64], strides = [1, 1]} : vector<8x128xf32> to vector<8x64xf32>
    %182 = vector.extract_strided_slice %178 {offsets = [0, 64], sizes = [8, 64], strides = [1, 1]} : vector<8x128xf32> to vector<8x64xf32>
    %183 = arith.mulf %180, %162 : vector<8x64xf32>
    %184 = arith.mulf %179, %182 : vector<8x64xf32>
    %185 = arith.addf %183, %184 : vector<8x64xf32>
    %186 = math.tanh %185 : vector<8x64xf32>
    %187 = arith.mulf %181, %186 : vector<8x64xf32>
    %188 = vector.extract_strided_slice %93 {offsets = [32, 0], sizes = [8, 256], strides = [1, 1]} : vector<64x256xf32> to vector<8x256xf32>
    %189 = vector.extract_strided_slice %93 {offsets = [24, 0], sizes = [8, 256], strides = [1, 1]} : vector<64x256xf32> to vector<8x256xf32>
    %190 = arith.select %84, %188, %189 : vector<8x256xi1>, vector<8x256xf32>
    %cst_55 = arith.constant dense<0.000000e+00> : vector<8x256xf32>
    %191 = tpu.matmul %187, %89, %cst_55 {dimension_numbers = #tpu.dot_dimension_numbers<[1], [0], [0], [1], [0, 0, 1, 1], [], []>} : vector<8x64xf32>, vector<64x256xf32>, vector<8x256xf32> -> vector<8x256xf32>
    %192 = arith.addf %190, %191 : vector<8x256xf32>
    %193 = arith.negf %192 : vector<8x256xf32>
    %194 = math.exp %193 : vector<8x256xf32>
    %cst_56 = arith.constant 1.000000e+00 : f32
    %195 = vector.broadcast %cst_56 : f32 to vector<8x256xf32>
    %196 = arith.addf %195, %194 : vector<8x256xf32>
    %197 = arith.divf %195, %196 : vector<8x256xf32>
    %198 = vector.extract_strided_slice %192 {offsets = [0, 128], sizes = [8, 128], strides = [1, 1]} : vector<8x256xf32> to vector<8x128xf32>
    %199 = math.tanh %198 : vector<8x128xf32>
    %200 = vector.extract_strided_slice %197 {offsets = [0, 128], sizes = [8, 128], strides = [1, 1]} : vector<8x256xf32> to vector<8x128xf32>
    %201 = arith.select %87, %199, %200 : vector<8x128xi1>, vector<8x128xf32>
    %202 = vector.extract_strided_slice %197 {offsets = [0, 0], sizes = [8, 64], strides = [1, 1]} : vector<8x256xf32> to vector<8x64xf32>
    %203 = vector.extract_strided_slice %197 {offsets = [0, 64], sizes = [8, 64], strides = [1, 1]} : vector<8x256xf32> to vector<8x64xf32>
    %204 = vector.extract_strided_slice %201 {offsets = [0, 0], sizes = [8, 64], strides = [1, 1]} : vector<8x128xf32> to vector<8x64xf32>
    %205 = vector.extract_strided_slice %201 {offsets = [0, 64], sizes = [8, 64], strides = [1, 1]} : vector<8x128xf32> to vector<8x64xf32>
    %206 = arith.mulf %203, %185 : vector<8x64xf32>
    %207 = arith.mulf %202, %205 : vector<8x64xf32>
    %208 = arith.addf %206, %207 : vector<8x64xf32>
    %209 = math.tanh %208 : vector<8x64xf32>
    %210 = arith.mulf %204, %209 : vector<8x64xf32>
    %211 = vector.extract_strided_slice %93 {offsets = [40, 0], sizes = [8, 256], strides = [1, 1]} : vector<64x256xf32> to vector<8x256xf32>
    %212 = vector.extract_strided_slice %93 {offsets = [16, 0], sizes = [8, 256], strides = [1, 1]} : vector<64x256xf32> to vector<8x256xf32>
    %213 = arith.select %84, %211, %212 : vector<8x256xi1>, vector<8x256xf32>
    %cst_57 = arith.constant dense<0.000000e+00> : vector<8x256xf32>
    %214 = tpu.matmul %210, %89, %cst_57 {dimension_numbers = #tpu.dot_dimension_numbers<[1], [0], [0], [1], [0, 0, 1, 1], [], []>} : vector<8x64xf32>, vector<64x256xf32>, vector<8x256xf32> -> vector<8x256xf32>
    %215 = arith.addf %213, %214 : vector<8x256xf32>
    %216 = arith.negf %215 : vector<8x256xf32>
    %217 = math.exp %216 : vector<8x256xf32>
    %cst_58 = arith.constant 1.000000e+00 : f32
    %218 = vector.broadcast %cst_58 : f32 to vector<8x256xf32>
    %219 = arith.addf %218, %217 : vector<8x256xf32>
    %220 = arith.divf %218, %219 : vector<8x256xf32>
    %221 = vector.extract_strided_slice %215 {offsets = [0, 128], sizes = [8, 128], strides = [1, 1]} : vector<8x256xf32> to vector<8x128xf32>
    %222 = math.tanh %221 : vector<8x128xf32>
    %223 = vector.extract_strided_slice %220 {offsets = [0, 128], sizes = [8, 128], strides = [1, 1]} : vector<8x256xf32> to vector<8x128xf32>
    %224 = arith.select %87, %222, %223 : vector<8x128xi1>, vector<8x128xf32>
    %225 = vector.extract_strided_slice %220 {offsets = [0, 0], sizes = [8, 64], strides = [1, 1]} : vector<8x256xf32> to vector<8x64xf32>
    %226 = vector.extract_strided_slice %220 {offsets = [0, 64], sizes = [8, 64], strides = [1, 1]} : vector<8x256xf32> to vector<8x64xf32>
    %227 = vector.extract_strided_slice %224 {offsets = [0, 0], sizes = [8, 64], strides = [1, 1]} : vector<8x128xf32> to vector<8x64xf32>
    %228 = vector.extract_strided_slice %224 {offsets = [0, 64], sizes = [8, 64], strides = [1, 1]} : vector<8x128xf32> to vector<8x64xf32>
    %229 = arith.mulf %226, %208 : vector<8x64xf32>
    %230 = arith.mulf %225, %228 : vector<8x64xf32>
    %231 = arith.addf %229, %230 : vector<8x64xf32>
    %232 = math.tanh %231 : vector<8x64xf32>
    %233 = arith.mulf %227, %232 : vector<8x64xf32>
    %234 = vector.extract_strided_slice %93 {offsets = [48, 0], sizes = [8, 256], strides = [1, 1]} : vector<64x256xf32> to vector<8x256xf32>
    %235 = vector.extract_strided_slice %93 {offsets = [8, 0], sizes = [8, 256], strides = [1, 1]} : vector<64x256xf32> to vector<8x256xf32>
    %236 = arith.select %84, %234, %235 : vector<8x256xi1>, vector<8x256xf32>
    %cst_59 = arith.constant dense<0.000000e+00> : vector<8x256xf32>
    %237 = tpu.matmul %233, %89, %cst_59 {dimension_numbers = #tpu.dot_dimension_numbers<[1], [0], [0], [1], [0, 0, 1, 1], [], []>} : vector<8x64xf32>, vector<64x256xf32>, vector<8x256xf32> -> vector<8x256xf32>
    %238 = arith.addf %236, %237 : vector<8x256xf32>
    %239 = arith.negf %238 : vector<8x256xf32>
    %240 = math.exp %239 : vector<8x256xf32>
    %cst_60 = arith.constant 1.000000e+00 : f32
    %241 = vector.broadcast %cst_60 : f32 to vector<8x256xf32>
    %242 = arith.addf %241, %240 : vector<8x256xf32>
    %243 = arith.divf %241, %242 : vector<8x256xf32>
    %244 = vector.extract_strided_slice %238 {offsets = [0, 128], sizes = [8, 128], strides = [1, 1]} : vector<8x256xf32> to vector<8x128xf32>
    %245 = math.tanh %244 : vector<8x128xf32>
    %246 = vector.extract_strided_slice %243 {offsets = [0, 128], sizes = [8, 128], strides = [1, 1]} : vector<8x256xf32> to vector<8x128xf32>
    %247 = arith.select %87, %245, %246 : vector<8x128xi1>, vector<8x128xf32>
    %248 = vector.extract_strided_slice %243 {offsets = [0, 0], sizes = [8, 64], strides = [1, 1]} : vector<8x256xf32> to vector<8x64xf32>
    %249 = vector.extract_strided_slice %243 {offsets = [0, 64], sizes = [8, 64], strides = [1, 1]} : vector<8x256xf32> to vector<8x64xf32>
    %250 = vector.extract_strided_slice %247 {offsets = [0, 0], sizes = [8, 64], strides = [1, 1]} : vector<8x128xf32> to vector<8x64xf32>
    %251 = vector.extract_strided_slice %247 {offsets = [0, 64], sizes = [8, 64], strides = [1, 1]} : vector<8x128xf32> to vector<8x64xf32>
    %252 = arith.mulf %249, %231 : vector<8x64xf32>
    %253 = arith.mulf %248, %251 : vector<8x64xf32>
    %254 = arith.addf %252, %253 : vector<8x64xf32>
    %255 = math.tanh %254 : vector<8x64xf32>
    %256 = arith.mulf %250, %255 : vector<8x64xf32>
    %257 = vector.extract_strided_slice %93 {offsets = [56, 0], sizes = [8, 256], strides = [1, 1]} : vector<64x256xf32> to vector<8x256xf32>
    %258 = vector.extract_strided_slice %93 {offsets = [0, 0], sizes = [8, 256], strides = [1, 1]} : vector<64x256xf32> to vector<8x256xf32>
    %259 = arith.select %84, %257, %258 : vector<8x256xi1>, vector<8x256xf32>
    %cst_61 = arith.constant dense<0.000000e+00> : vector<8x256xf32>
    %260 = tpu.matmul %256, %89, %cst_61 {dimension_numbers = #tpu.dot_dimension_numbers<[1], [0], [0], [1], [0, 0, 1, 1], [], []>} : vector<8x64xf32>, vector<64x256xf32>, vector<8x256xf32> -> vector<8x256xf32>
    %261 = arith.addf %259, %260 : vector<8x256xf32>
    %262 = arith.negf %261 : vector<8x256xf32>
    %263 = math.exp %262 : vector<8x256xf32>
    %cst_62 = arith.constant 1.000000e+00 : f32
    %264 = vector.broadcast %cst_62 : f32 to vector<8x256xf32>
    %265 = arith.addf %264, %263 : vector<8x256xf32>
    %266 = arith.divf %264, %265 : vector<8x256xf32>
    %267 = vector.extract_strided_slice %261 {offsets = [0, 128], sizes = [8, 128], strides = [1, 1]} : vector<8x256xf32> to vector<8x128xf32>
    %268 = math.tanh %267 : vector<8x128xf32>
    %269 = vector.extract_strided_slice %266 {offsets = [0, 128], sizes = [8, 128], strides = [1, 1]} : vector<8x256xf32> to vector<8x128xf32>
    %270 = arith.select %87, %268, %269 : vector<8x128xi1>, vector<8x128xf32>
    %271 = vector.extract_strided_slice %266 {offsets = [0, 0], sizes = [8, 64], strides = [1, 1]} : vector<8x256xf32> to vector<8x64xf32>
    %272 = vector.extract_strided_slice %266 {offsets = [0, 64], sizes = [8, 64], strides = [1, 1]} : vector<8x256xf32> to vector<8x64xf32>
    %273 = vector.extract_strided_slice %270 {offsets = [0, 0], sizes = [8, 64], strides = [1, 1]} : vector<8x128xf32> to vector<8x64xf32>
    %274 = vector.extract_strided_slice %270 {offsets = [0, 64], sizes = [8, 64], strides = [1, 1]} : vector<8x128xf32> to vector<8x64xf32>
    %275 = arith.mulf %272, %254 : vector<8x64xf32>
    %276 = arith.mulf %271, %274 : vector<8x64xf32>
    %277 = arith.addf %275, %276 : vector<8x64xf32>
    %278 = math.tanh %277 : vector<8x64xf32>
    %279 = arith.mulf %273, %278 : vector<8x64xf32>
    %280 = tpu.concatenate %47, %57, %279 in 1 : vector<8x32xf32>, vector<8x32xf32>, vector<8x64xf32> -> vector<8x128xf32>
    %c0_63 = arith.constant 0 : index
    %c0_64 = arith.constant 0 : index
    %281 = vector.load %arg6[%c0_63, %c0_64] : memref<32x32xf32, #tpu.memory_space<vmem>>, vector<32x32xf32>
    %282 = vector.shape_cast %37 : vector<16x32xf32> to vector<2x8x32xf32>
    %cst_65 = arith.constant dense<0.000000e+00> : vector<2x32xf32>
    %283 = vector.multi_reduction <add>, %282, %cst_65 [1] : vector<2x8x32xf32> to vector<2x32xf32>
    %284 = vector.shape_cast %283 : vector<2x32xf32> to vector<2x1x32xf32>
    %cst_66 = arith.constant 8.000000e+00 : f32
    %285 = vector.broadcast %cst_66 : f32 to vector<2x1x32xf32>
    %286 = arith.divf %284, %285 : vector<2x1x32xf32>
    %cst_67 = arith.constant dense<0.000000e+00> : vector<16x32xf32>
    %287 = tpu.matmul %37, %281, %cst_67 {dimension_numbers = #tpu.dot_dimension_numbers<[1], [0], [0], [1], [0, 0, 1, 1], [], []>} : vector<16x32xf32>, vector<32x32xf32>, vector<16x32xf32> -> vector<16x32xf32>
    %288 = vector.shape_cast %287 : vector<16x32xf32> to vector<2x8x32xf32>
    %289 = vector.broadcast %286 : vector<2x1x32xf32> to vector<2x8x32xf32>
    %290 = arith.mulf %288, %289 : vector<2x8x32xf32>
    %cst_68 = arith.constant dense<0.000000e+00> : vector<2x8xf32>
    %291 = vector.multi_reduction <add>, %290, %cst_68 [2] : vector<2x8x32xf32> to vector<2x8xf32>
    %292 = vector.shape_cast %291 : vector<2x8xf32> to vector<2x8x1xf32>
    %cst_69 = arith.constant dense<0xFF800000> : vector<2x1xf32>
    %293 = vector.multi_reduction <maximumf>, %292, %cst_69 [1] : vector<2x8x1xf32> to vector<2x1xf32>
    %294 = vector.shape_cast %293 : vector<2x1xf32> to vector<2x1x1xf32>
    %295 = vector.broadcast %294 : vector<2x1x1xf32> to vector<2x8x1xf32>
    %296 = arith.subf %292, %295 : vector<2x8x1xf32>
    %297 = math.exp %296 : vector<2x8x1xf32>
    %cst_70 = arith.constant dense<0.000000e+00> : vector<2x1xf32>
    %298 = vector.multi_reduction <add>, %297, %cst_70 [1] : vector<2x8x1xf32> to vector<2x1xf32>
    %299 = vector.shape_cast %298 : vector<2x1xf32> to vector<2x1x1xf32>
    %300 = tpu.reciprocal %299 {approx = true} : vector<2x1x1xf32> -> vector<2x1x1xf32>
    %301 = vector.broadcast %300 : vector<2x1x1xf32> to vector<2x8x1xf32>
    %302 = arith.mulf %297, %301 : vector<2x8x1xf32>
    %303 = vector.broadcast %302 : vector<2x8x1xf32> to vector<2x8x32xf32>
    %304 = arith.mulf %303, %282 : vector<2x8x32xf32>
    %cst_71 = arith.constant dense<0.000000e+00> : vector<2x32xf32>
    %305 = vector.multi_reduction <add>, %304, %cst_71 [1] : vector<2x8x32xf32> to vector<2x32xf32>
    %c0_72 = arith.constant 0 : index
    %c0_73 = arith.constant 0 : index
    %306 = vector.load %arg13[%c0_72, %c0_73] : memref<2x32xf32, #tpu.memory_space<vmem>>, vector<2x32xf32>
    tpu.vector_store %arg13[%c0_72, %c0_73], %305 {strides = array<i32>} : memref<2x32xf32, #tpu.memory_space<vmem>>, vector<2x32xf32>,
    %c0_74 = arith.constant 0 : index
    %c0_75 = arith.constant 0 : index
    %307 = vector.load %arg7[%c0_74, %c0_75] : memref<128x128xf32, #tpu.memory_space<vmem>>, vector<128x128xf32>
    %308 = vector.shape_cast %280 : vector<8x128xf32> to vector<2x4x128xf32>
    %cst_76 = arith.constant dense<0.000000e+00> : vector<2x128xf32>
    %309 = vector.multi_reduction <add>, %308, %cst_76 [1] : vector<2x4x128xf32> to vector<2x128xf32>
    %310 = vector.shape_cast %309 : vector<2x128xf32> to vector<2x1x128xf32>
    %cst_77 = arith.constant 4.000000e+00 : f32
    %311 = vector.broadcast %cst_77 : f32 to vector<2x1x128xf32>
    %312 = arith.divf %310, %311 : vector<2x1x128xf32>
    %cst_78 = arith.constant dense<0.000000e+00> : vector<8x128xf32>
    %313 = tpu.matmul %280, %307, %cst_78 {dimension_numbers = #tpu.dot_dimension_numbers<[1], [0], [0], [1], [0, 0, 1, 1], [], []>} : vector<8x128xf32>, vector<128x128xf32>, vector<8x128xf32> -> vector<8x128xf32>
    %314 = vector.shape_cast %313 : vector<8x128xf32> to vector<2x4x128xf32>
    %315 = vector.broadcast %312 : vector<2x1x128xf32> to vector<2x4x128xf32>
    %316 = arith.mulf %314, %315 : vector<2x4x128xf32>
    %cst_79 = arith.constant dense<0.000000e+00> : vector<2x4xf32>
    %317 = vector.multi_reduction <add>, %316, %cst_79 [2] : vector<2x4x128xf32> to vector<2x4xf32>
    %318 = vector.shape_cast %317 : vector<2x4xf32> to vector<2x4x1xf32>
    %cst_80 = arith.constant dense<0xFF800000> : vector<2x1xf32>
    %319 = vector.multi_reduction <maximumf>, %318, %cst_80 [1] : vector<2x4x1xf32> to vector<2x1xf32>
    %320 = vector.shape_cast %319 : vector<2x1xf32> to vector<2x1x1xf32>
    %321 = vector.broadcast %320 : vector<2x1x1xf32> to vector<2x4x1xf32>
    %322 = arith.subf %318, %321 : vector<2x4x1xf32>
    %323 = math.exp %322 : vector<2x4x1xf32>
    %cst_81 = arith.constant dense<0.000000e+00> : vector<2x1xf32>
    %324 = vector.multi_reduction <add>, %323, %cst_81 [1] : vector<2x4x1xf32> to vector<2x1xf32>
    %325 = vector.shape_cast %324 : vector<2x1xf32> to vector<2x1x1xf32>
    %326 = tpu.reciprocal %325 {approx = true} : vector<2x1x1xf32> -> vector<2x1x1xf32>
    %327 = vector.broadcast %326 : vector<2x1x1xf32> to vector<2x4x1xf32>
    %328 = arith.mulf %323, %327 : vector<2x4x1xf32>
    %329 = vector.broadcast %328 : vector<2x4x1xf32> to vector<2x4x128xf32>
    %330 = arith.mulf %329, %308 : vector<2x4x128xf32>
    %cst_82 = arith.constant dense<0.000000e+00> : vector<2x128xf32>
    %331 = vector.multi_reduction <add>, %330, %cst_82 [1] : vector<2x4x128xf32> to vector<2x128xf32>
    %c0_83 = arith.constant 0 : index
    %c0_84 = arith.constant 0 : index
    %332 = vector.load %arg8[%c0_83, %c0_84] : memref<128x32xf32, #tpu.memory_space<vmem>>, vector<128x32xf32>
    %cst_85 = arith.constant dense<0.000000e+00> : vector<2x32xf32>
    %333 = tpu.matmul %331, %332, %cst_85 {dimension_numbers = #tpu.dot_dimension_numbers<[1], [0], [0], [1], [0, 0, 1, 1], [], []>} : vector<2x128xf32>, vector<128x32xf32>, vector<2x32xf32> -> vector<2x32xf32>
    %c0_86 = arith.constant 0 : index
    %c0_87 = arith.constant 0 : index
    %334 = vector.load %arg9[%c0_86, %c0_87] : memref<1x32xf32, #tpu.memory_space<vmem>>, vector<1x32xf32>
    %335 = vector.broadcast %334 : vector<1x32xf32> to vector<2x32xf32>
    %336 = arith.addf %333, %335 : vector<2x32xf32>
    %c0_88 = arith.constant 0 : index
    %c0_89 = arith.constant 0 : index
    %337 = vector.load %arg14[%c0_88, %c0_89] : memref<2x32xf32, #tpu.memory_space<vmem>>, vector<2x32xf32>
    tpu.vector_store %arg14[%c0_88, %c0_89], %336 {strides = array<i32>} : memref<2x32xf32, #tpu.memory_space<vmem>>, vector<2x32xf32>,
    return
  }
}

</mosaic_0001>

<llo_original>
// kernel: _lambda_.1
$region0: #{_lambda_.1}
  #allocation0 [shape = 'u32[]', space=smem, size = 0x4, offset = 0x4, fixed_abs, tag = 'smem constant byte address 0x4 - core index']
  #allocation1 [shape = 'u32[72,128]{1,0:T(1,128)}', space=vmem, size = 0x9000, scoped, tag = 'internal scratch']
  %s0 = inlined_call_operand.vmem [shape: s32[16,1], index: 0, kind: input, shape index: {}]
  %s1 = inlined_call_operand.vmem [shape: s32[64,1], index: 1, kind: input, shape index: {}]
  %s2 = inlined_call_operand.vmem [shape: s32[64,1], index: 2, kind: input, shape index: {}]
  %s3 = inlined_call_operand.vmem [shape: s32[64,1], index: 3, kind: input, shape index: {}]
  %s4 = inlined_call_operand.vmem [shape: f32[50,32], index: 4, kind: input, shape index: {}]
  %s5 = inlined_call_operand.vmem [shape: f32[60,32], index: 5, kind: input, shape index: {}]
  %s6 = inlined_call_operand.vmem [shape: f32[32,32], index: 6, kind: input, shape index: {}]
  %s7 = inlined_call_operand.vmem [shape: f32[128,128], index: 7, kind: input, shape index: {}]
  %s8 = inlined_call_operand.vmem [shape: f32[128,32], index: 8, kind: input, shape index: {}]
  %s9 = inlined_call_operand.vmem [shape: f32[1,32], index: 9, kind: input, shape index: {}]
  %s10 = inlined_call_operand.vmem [shape: f32[32,256], index: 10, kind: input, shape index: {}]
  %s11 = inlined_call_operand.vmem [shape: f32[64,256], index: 11, kind: input, shape index: {}]
  %s12 = inlined_call_operand.vmem [shape: f32[1,256], index: 12, kind: input, shape index: {}]
  %s13 = inlined_call_operand.hbm [shape: f32[2,32], index: 13, kind: output, shape index: {0}]
  %s14 = inlined_call_operand.hbm [shape: f32[2,32], index: 14, kind: output, shape index: {1}]
  %15 = xla_tuple %s13, %s14
  %s16 = sld [smem:[#allocation0]]
  $region70: #{_lambda_.1} parent=0
    _
  %s18 = ssub.s32 1, %s16
  %s19 = scalar_select 0, %s18, %s16
  $region1: #{_lambda_.1} parent=0
    #allocation2 [shape = 'u8[1024]{0}', space=vmem, size = 0x400, scoped, tag = 'output window, operand 0, single buffered']
    #allocation3 [shape = 's32[1]{0}', space=sflag, size = 0x4, scoped, tag = 'scoped memory for _lambda_.1']
    #allocation4 [shape = 'u8[1024]{0}', space=vmem, size = 0x400, scoped, tag = 'output window, operand 1, single buffered']
    #allocation5 [shape = 's32[1]{0}', space=sflag, size = 0x4, scoped, tag = 'scoped memory for _lambda_.1']
    %20 = vsyncpa [#allocation3], 0
    %21 = vsyncpa [#allocation5], 0
    // Predicated region
    $region2: #{_lambda_.1} parent=1 // pred_check
      _
    $region3: #{_lambda_.1} parent=1 // pred_check_branch
      %23 = sbr.rel (0) target = $region5
    $region4: #{_lambda_.1} parent=1 // pred_region
      _
    $region5: #{_lambda_.1} parent=1 // pred_fallthru
      _
    // Predicated region
    $region6: #{_lambda_.1} parent=1 // pred_check
      _
    $region7: #{_lambda_.1} parent=1 // pred_check_branch
      %25 = sbr.rel (0) target = $region9
    $region8: #{_lambda_.1} parent=1 // pred_region
      _
    $region9: #{_lambda_.1} parent=1 // pred_fallthru
      _
    // Predicated region
    $region10: #{_lambda_.1} parent=1 // pred_check
      _
    $region11: #{_lambda_.1} parent=1 // pred_check_branch
      %27 = sbr.rel (0) target = $region13
    $region12: #{_lambda_.1} parent=1 // pred_region
      _
    $region13: #{_lambda_.1} parent=1 // pred_fallthru
      _
    // Predicated region
    $region14: #{_lambda_.1} parent=1 // pred_check
      _
    $region15: #{_lambda_.1} parent=1 // pred_check_branch
      %29 = sbr.rel (0) target = $region17
    $region16: #{_lambda_.1} parent=1 // pred_region
      _
    $region17: #{_lambda_.1} parent=1 // pred_fallthru
      _
    // Predicated region
    $region18: #{_lambda_.1} parent=1 // pred_check
      _
    $region19: #{_lambda_.1} parent=1 // pred_check_branch
      %31 = sbr.rel (0) target = $region21
    $region20: #{_lambda_.1} parent=1 // pred_region
      _
    $region21: #{_lambda_.1} parent=1 // pred_fallthru
      _
    // Predicated region
    $region22: #{_lambda_.1} parent=1 // pred_check
      _
    $region23: #{_lambda_.1} parent=1 // pred_check_branch
      %33 = sbr.rel (0) target = $region25
    $region24: #{_lambda_.1} parent=1 // pred_region
      _
    $region25: #{_lambda_.1} parent=1 // pred_fallthru
      _
    // Predicated region
    $region26: #{_lambda_.1} parent=1 // pred_check
      _
    $region27: #{_lambda_.1} parent=1 // pred_check_branch
      %35 = sbr.rel (0) target = $region29
    $region28: #{_lambda_.1} parent=1 // pred_region
      _
    $region29: #{_lambda_.1} parent=1 // pred_fallthru
      _
    // Predicated region
    $region30: #{_lambda_.1} parent=1 // pred_check
      _
    $region31: #{_lambda_.1} parent=1 // pred_check_branch
      %37 = sbr.rel (0) target = $region33
    $region32: #{_lambda_.1} parent=1 // pred_region
      _
    $region33: #{_lambda_.1} parent=1 // pred_fallthru
      _
    // Predicated region
    $region34: #{_lambda_.1} parent=1 // pred_check
      _
    $region35: #{_lambda_.1} parent=1 // pred_check_branch
      %39 = sbr.rel (0) target = $region37
    $region36: #{_lambda_.1} parent=1 // pred_region
      _
    $region37: #{_lambda_.1} parent=1 // pred_fallthru
      _
    // Predicated region
    $region38: #{_lambda_.1} parent=1 // pred_check
      _
    $region39: #{_lambda_.1} parent=1 // pred_check_branch
      %41 = sbr.rel (0) target = $region41
    $region40: #{_lambda_.1} parent=1 // pred_region
      _
    $region41: #{_lambda_.1} parent=1 // pred_fallthru
      _
    // Predicated region
    $region42: #{_lambda_.1} parent=1 // pred_check
      _
    $region43: #{_lambda_.1} parent=1 // pred_check_branch
      %43 = sbr.rel (0) target = $region45
    $region44: #{_lambda_.1} parent=1 // pred_region
      _
    $region45: #{_lambda_.1} parent=1 // pred_fallthru
      _
    // Predicated region
    $region46: #{_lambda_.1} parent=1 // pred_check
      _
    $region47: #{_lambda_.1} parent=1 // pred_check_branch
      %45 = sbr.rel (0) target = $region49
    $region48: #{_lambda_.1} parent=1 // pred_region
      _
    $region49: #{_lambda_.1} parent=1 // pred_fallthru
      _
    // Predicated region
    $region50: #{_lambda_.1} parent=1 // pred_check
      _
    $region51: #{_lambda_.1} parent=1 // pred_check_branch
      %47 = sbr.rel (0) target = $region53
    $region52: #{_lambda_.1} parent=1 // pred_region
      _
    $region53: #{_lambda_.1} parent=1 // pred_fallthru
      _
    %v48 = vld [vmem:[%s4] sm:$0xff]
    %v49 = vld [vmem:[%s4 + $0x8] sm:$0xff]
    %v50 = vld [vmem:[%s4 + $0x10] sm:$0xff]
    %v51 = vld [vmem:[%s4 + $0x18] sm:$0xff]
    %v52 = vld [vmem:[%s4 + $0x20] sm:$0xff]
    %v53 = vld [vmem:[%s4 + $0x28] sm:$0xff]
    %v54 = vld [vmem:[%s4 + $0x30] sm:$0x3]
    %v55 = vmul.f32 %v48, %v48
    %v56 = vmul.f32 %v49, %v49
    %v57 = vmul.f32 %v50, %v50
    %v58 = vmul.f32 %v51, %v51
    %v59 = vmul.f32 %v52, %v52
    %v60 = vmul.f32 %v53, %v53
    %v61 = vmul.f32 %v54, %v54
    %vm62 = vcmask 261120
    %v63 = vsel %vm62, %v55, 0.0
    %64 = vadd.xlane.f32.xlu0 %v63
    %v65 = vpop.xlane.xlu0 %64
    %v66 = vsel %vm62, %v56, 0.0
    %67 = vadd.xlane.f32.xlu0 %v66
    %v68 = vpop.xlane.xlu0 %67
    %v69 = vsel %vm62, %v57, 0.0
    %70 = vadd.xlane.f32.xlu0 %v69
    %v71 = vpop.xlane.xlu0 %70
    %v72 = vsel %vm62, %v58, 0.0
    %73 = vadd.xlane.f32.xlu0 %v72
    %v74 = vpop.xlane.xlu0 %73
    %v75 = vsel %vm62, %v59, 0.0
    %76 = vadd.xlane.f32.xlu0 %v75
    %v77 = vpop.xlane.xlu0 %76
    %v78 = vsel %vm62, %v60, 0.0
    %79 = vadd.xlane.f32.xlu0 %v78
    %v80 = vpop.xlane.xlu0 %79
    %vm81 = vcmask 254976
    %v82 = vsel %vm81, %v61, 0.0
    %83 = vadd.xlane.f32.xlu0 %v82
    %v84 = vpop.xlane.xlu0 %83
    %v85 = vrsqrt.pop %v65
    %v86 = vmul.f32 %v85, %v65
    %v87 = vmul.f32 %v86, %v85
    %v88 = vmul.f32 0.5, %v87
    %v89 = vsub.f32 1.5, %v88
    %v90 = vmul.f32 %v85, %v89
    %v91 = vmul.f32 %v65, %v90
    %vm92 = vcmp.eq.f32.partialorder %v65, inf
    %v93 = vsel %vm92, %v65, %v91
    %vm94 = vcmp.eq.f32.partialorder %v65, 0.0
    %v95 = vand.u32 %v65, 2147483648
    %v96 = vsel %vm94, %v95, %v93
    %v97 = vrsqrt.pop %v68
    %v98 = vmul.f32 %v97, %v68
    %v99 = vmul.f32 %v98, %v97
    %v100 = vmul.f32 0.5, %v99
    %v101 = vsub.f32 1.5, %v100
    %v102 = vmul.f32 %v97, %v101
    %v103 = vmul.f32 %v68, %v102
    %vm104 = vcmp.eq.f32.partialorder %v68, inf
    %v105 = vsel %vm104, %v68, %v103
    %vm106 = vcmp.eq.f32.partialorder %v68, 0.0
    %v107 = vand.u32 %v68, 2147483648
    %v108 = vsel %vm106, %v107, %v105
    %v109 = vrsqrt.pop %v71
    %v110 = vmul.f32 %v109, %v71
    %v111 = vmul.f32 %v110, %v109
    %v112 = vmul.f32 0.5, %v111
    %v113 = vsub.f32 1.5, %v112
    %v114 = vmul.f32 %v109, %v113
    %v115 = vmul.f32 %v71, %v114
    %vm116 = vcmp.eq.f32.partialorder %v71, inf
    %v117 = vsel %vm116, %v71, %v115
    %vm118 = vcmp.eq.f32.partialorder %v71, 0.0
    %v119 = vand.u32 %v71, 2147483648
    %v120 = vsel %vm118, %v119, %v117
    %v121 = vrsqrt.pop %v74
    %v122 = vmul.f32 %v121, %v74
    %v123 = vmul.f32 %v122, %v121
    %v124 = vmul.f32 0.5, %v123
    %v125 = vsub.f32 1.5, %v124
    %v126 = vmul.f32 %v121, %v125
    %v127 = vmul.f32 %v74, %v126
    %vm128 = vcmp.eq.f32.partialorder %v74, inf
    %v129 = vsel %vm128, %v74, %v127
    %vm130 = vcmp.eq.f32.partialorder %v74, 0.0
    %v131 = vand.u32 %v74, 2147483648
    %v132 = vsel %vm130, %v131, %v129
    %v133 = vrsqrt.pop %v77
    %v134 = vmul.f32 %v133, %v77
    %v135 = vmul.f32 %v134, %v133
    %v136 = vmul.f32 0.5, %v135
    %v137 = vsub.f32 1.5, %v136
    %v138 = vmul.f32 %v133, %v137
    %v139 = vmul.f32 %v77, %v138
    %vm140 = vcmp.eq.f32.partialorder %v77, inf
    %v141 = vsel %vm140, %v77, %v139
    %vm142 = vcmp.eq.f32.partialorder %v77, 0.0
    %v143 = vand.u32 %v77, 2147483648
    %v144 = vsel %vm142, %v143, %v141
    %v145 = vrsqrt.pop %v80
    %v146 = vmul.f32 %v145, %v80
    %v147 = vmul.f32 %v146, %v145
    %v148 = vmul.f32 0.5, %v147
    %v149 = vsub.f32 1.5, %v148
    %v150 = vmul.f32 %v145, %v149
    %v151 = vmul.f32 %v80, %v150
    %vm152 = vcmp.eq.f32.partialorder %v80, inf
    %v153 = vsel %vm152, %v80, %v151
    %vm154 = vcmp.eq.f32.partialorder %v80, 0.0
    %v155 = vand.u32 %v80, 2147483648
    %v156 = vsel %vm154, %v155, %v153
    %v157 = vrsqrt.pop %v84
    %v158 = vmul.f32 %v157, %v84
    %v159 = vmul.f32 %v158, %v157
    %v160 = vmul.f32 0.5, %v159
    %v161 = vsub.f32 1.5, %v160
    %v162 = vmul.f32 %v157, %v161
    %v163 = vmul.f32 %v84, %v162
    %vm164 = vcmp.eq.f32.partialorder %v84, inf
    %v165 = vsel %vm164, %v84, %v163
    %vm166 = vcmp.eq.f32.partialorder %v84, 0.0
    %v167 = vand.u32 %v84, 2147483648
    %v168 = vsel %vm166, %v167, %v165
    %vm169 = vcmp.gt.f32.partialorder %v96, 1.0
    %vm170 = vcmp.gt.f32.partialorder %v108, 1.0
    %vm171 = vcmp.gt.f32.partialorder %v120, 1.0
    %vm172 = vcmp.gt.f32.partialorder %v132, 1.0
    %vm173 = vcmp.gt.f32.partialorder %v144, 1.0
    %vm174 = vcmp.gt.f32.partialorder %v156, 1.0
    %vm175 = vcmp.gt.f32.partialorder %v168, 1.0
    %v176 = vadd.f32 %v96, 1e-07
    %v177 = vadd.f32 %v108, 1e-07
    %v178 = vadd.f32 %v120, 1e-07
    %v179 = vadd.f32 %v132, 1e-07
    %v180 = vadd.f32 %v144, 1e-07
    %v181 = vadd.f32 %v156, 1e-07
    %v182 = vadd.f32 %v168, 1e-07
    %v183 = vrcp.pop %v176
    %v184 = vmul.f32 %v176, %v183
    %v185 = vsub.f32 1.0, %v184
    %v186 = vmul.f32 %v183, %v185
    %v187 = vadd.f32 %v183, %v186
    %vm188 = vweird.f32 %v176
    %vm189 = vweird.f32 %v183
    %vm190 = vmor %vm188, %vm189
    %v191 = vsel %vm190, %v183, %v187
    %v192 = vand.u32 2147483647, %v176
    %vm193 = vcmp.eq.f32.partialorder %v192, 8.507059e+37
    %v194 = vand.u32 %v176, 2147483648
    %v195 = vor.u32 1.1754944e-38, %v194
    %v196 = vsel %vm193, %v195, %v191
    %v197 = vmul.f32 1.0, %v196
    %v198 = vrcp.pop %v177
    %v199 = vmul.f32 %v177, %v198
    %v200 = vsub.f32 1.0, %v199
    %v201 = vmul.f32 %v198, %v200
    %v202 = vadd.f32 %v198, %v201
    %vm203 = vweird.f32 %v177
    %vm204 = vweird.f32 %v198
    %vm205 = vmor %vm203, %vm204
    %v206 = vsel %vm205, %v198, %v202
    %v207 = vand.u32 2147483647, %v177
    %vm208 = vcmp.eq.f32.partialorder %v207, 8.507059e+37
    %v209 = vand.u32 %v177, 2147483648
    %v210 = vor.u32 1.1754944e-38, %v209
    %v211 = vsel %vm208, %v210, %v206
    %v212 = vmul.f32 1.0, %v211
    %v213 = vrcp.pop %v178
    %v214 = vmul.f32 %v178, %v213
    %v215 = vsub.f32 1.0, %v214
    %v216 = vmul.f32 %v213, %v215
    %v217 = vadd.f32 %v213, %v216
    %vm218 = vweird.f32 %v178
    %vm219 = vweird.f32 %v213
    %vm220 = vmor %vm218, %vm219
    %v221 = vsel %vm220, %v213, %v217
    %v222 = vand.u32 2147483647, %v178
    %vm223 = vcmp.eq.f32.partialorder %v222, 8.507059e+37
    %v224 = vand.u32 %v178, 2147483648
    %v225 = vor.u32 1.1754944e-38, %v224
    %v226 = vsel %vm223, %v225, %v221
    %v227 = vmul.f32 1.0, %v226
    %v228 = vrcp.pop %v179
    %v229 = vmul.f32 %v179, %v228
    %v230 = vsub.f32 1.0, %v229
    %v231 = vmul.f32 %v228, %v230
    %v232 = vadd.f32 %v228, %v231
    %vm233 = vweird.f32 %v179
    %vm234 = vweird.f32 %v228
    %vm235 = vmor %vm233, %vm234
    %v236 = vsel %vm235, %v228, %v232
    %v237 = vand.u32 2147483647, %v179
    %vm238 = vcmp.eq.f32.partialorder %v237, 8.507059e+37
    %v239 = vand.u32 %v179, 2147483648
    %v240 = vor.u32 1.1754944e-38, %v239
    %v241 = vsel %vm238, %v240, %v236
    %v242 = vmul.f32 1.0, %v241
    %v243 = vrcp.pop %v180
    %v244 = vmul.f32 %v180, %v243
    %v245 = vsub.f32 1.0, %v244
    %v246 = vmul.f32 %v243, %v245
    %v247 = vadd.f32 %v243, %v246
    %vm248 = vweird.f32 %v180
    %vm249 = vweird.f32 %v243
    %vm250 = vmor %vm248, %vm249
    %v251 = vsel %vm250, %v243, %v247
    %v252 = vand.u32 2147483647, %v180
    %vm253 = vcmp.eq.f32.partialorder %v252, 8.507059e+37
    %v254 = vand.u32 %v180, 2147483648
    %v255 = vor.u32 1.1754944e-38, %v254
    %v256 = vsel %vm253, %v255, %v251
    %v257 = vmul.f32 1.0, %v256
    %v258 = vrcp.pop %v181
    %v259 = vmul.f32 %v181, %v258
    %v260 = vsub.f32 1.0, %v259
    %v261 = vmul.f32 %v258, %v260
    %v262 = vadd.f32 %v258, %v261
    %vm263 = vweird.f32 %v181
    %vm264 = vweird.f32 %v258
    %vm265 = vmor %vm263, %vm264
    %v266 = vsel %vm265, %v258, %v262
    %v267 = vand.u32 2147483647, %v181
    %vm268 = vcmp.eq.f32.partialorder %v267, 8.507059e+37
    %v269 = vand.u32 %v181, 2147483648
    %v270 = vor.u32 1.1754944e-38, %v269
    %v271 = vsel %vm268, %v270, %v266
    %v272 = vmul.f32 1.0, %v271
    %v273 = vrcp.pop %v182
    %v274 = vmul.f32 %v182, %v273
    %v275 = vsub.f32 1.0, %v274
    %v276 = vmul.f32 %v273, %v275
    %v277 = vadd.f32 %v273, %v276
    %vm278 = vweird.f32 %v182
    %vm279 = vweird.f32 %v273
    %vm280 = vmor %vm278, %vm279
    %v281 = vsel %vm280, %v273, %v277
    %v282 = vand.u32 2147483647, %v182
    %vm283 = vcmp.eq.f32.partialorder %v282, 8.507059e+37
    %v284 = vand.u32 %v182, 2147483648
    %v285 = vor.u32 1.1754944e-38, %v284
    %v286 = vsel %vm283, %v285, %v281
    %v287 = vmul.f32 1.0, %v286
    %v288 = vsel %vm169, %v197, 1.0
    %v289 = vsel %vm170, %v212, 1.0
    %v290 = vsel %vm171, %v227, 1.0
    %v291 = vsel %vm172, %v242, 1.0
    %v292 = vsel %vm173, %v257, 1.0
    %v293 = vsel %vm174, %v272, 1.0
    %v294 = vsel %vm175, %v287, 1.0
    %v295 = vmul.f32 %v48, %v288
    %v296 = vmul.f32 %v49, %v289
    %v297 = vmul.f32 %v50, %v290
    %v298 = vmul.f32 %v51, %v291
    %v299 = vmul.f32 %v52, %v292
    %v300 = vmul.f32 %v53, %v293
    %v301 = vmul.f32 %v54, %v294
    %v302 = vld [vmem:[%s5] sm:$0xff]
    %v303 = vld [vmem:[%s5 + $0x8] sm:$0xff]
    %v304 = vld [vmem:[%s5 + $0x10] sm:$0xff]
    %v305 = vld [vmem:[%s5 + $0x18] sm:$0xff]
    %v306 = vld [vmem:[%s5 + $0x20] sm:$0xff]
    %v307 = vld [vmem:[%s5 + $0x28] sm:$0xff]
    %v308 = vld [vmem:[%s5 + $0x30] sm:$0xff]
    %v309 = vld [vmem:[%s5 + $0x38] sm:$0xf]
    %v310 = vmul.f32 %v302, %v302
    %v311 = vmul.f32 %v303, %v303
    %v312 = vmul.f32 %v304, %v304
    %v313 = vmul.f32 %v305, %v305
    %v314 = vmul.f32 %v306, %v306
    %v315 = vmul.f32 %v307, %v307
    %v316 = vmul.f32 %v308, %v308
    %v317 = vmul.f32 %v309, %v309
    %v318 = vsel %vm62, %v310, 0.0
    %319 = vadd.xlane.f32.xlu0 %v318
    %v320 = vpop.xlane.xlu0 %319
    %v321 = vsel %vm62, %v311, 0.0
    %322 = vadd.xlane.f32.xlu0 %v321
    %v323 = vpop.xlane.xlu0 %322
    %v324 = vsel %vm62, %v312, 0.0
    %325 = vadd.xlane.f32.xlu0 %v324
    %v326 = vpop.xlane.xlu0 %325
    %v327 = vsel %vm62, %v313, 0.0
    %328 = vadd.xlane.f32.xlu0 %v327
    %v329 = vpop.xlane.xlu0 %328
    %v330 = vsel %vm62, %v314, 0.0
    %331 = vadd.xlane.f32.xlu0 %v330
    %v332 = vpop.xlane.xlu0 %331
    %v333 = vsel %vm62, %v315, 0.0
    %334 = vadd.xlane.f32.xlu0 %v333
    %v335 = vpop.xlane.xlu0 %334
    %v336 = vsel %vm62, %v316, 0.0
    %337 = vadd.xlane.f32.xlu0 %v336
    %v338 = vpop.xlane.xlu0 %337
    %vm339 = vcmask 257024
    %v340 = vsel %vm339, %v317, 0.0
    %341 = vadd.xlane.f32.xlu0 %v340
    %v342 = vpop.xlane.xlu0 %341
    %v343 = vrsqrt.pop %v320
    %v344 = vmul.f32 %v343, %v320
    %v345 = vmul.f32 %v344, %v343
    %v346 = vmul.f32 0.5, %v345
    %v347 = vsub.f32 1.5, %v346
    %v348 = vmul.f32 %v343, %v347
    %v349 = vmul.f32 %v320, %v348
    %vm350 = vcmp.eq.f32.partialorder %v320, inf
    %v351 = vsel %vm350, %v320, %v349
    %vm352 = vcmp.eq.f32.partialorder %v320, 0.0
    %v353 = vand.u32 %v320, 2147483648
    %v354 = vsel %vm352, %v353, %v351
    %v355 = vrsqrt.pop %v323
    %v356 = vmul.f32 %v355, %v323
    %v357 = vmul.f32 %v356, %v355
    %v358 = vmul.f32 0.5, %v357
    %v359 = vsub.f32 1.5, %v358
    %v360 = vmul.f32 %v355, %v359
    %v361 = vmul.f32 %v323, %v360
    %vm362 = vcmp.eq.f32.partialorder %v323, inf
    %v363 = vsel %vm362, %v323, %v361
    %vm364 = vcmp.eq.f32.partialorder %v323, 0.0
    %v365 = vand.u32 %v323, 2147483648
    %v366 = vsel %vm364, %v365, %v363
    %v367 = vrsqrt.pop %v326
    %v368 = vmul.f32 %v367, %v326
    %v369 = vmul.f32 %v368, %v367
    %v370 = vmul.f32 0.5, %v369
    %v371 = vsub.f32 1.5, %v370
    %v372 = vmul.f32 %v367, %v371
    %v373 = vmul.f32 %v326, %v372
    %vm374 = vcmp.eq.f32.partialorder %v326, inf
    %v375 = vsel %vm374, %v326, %v373
    %vm376 = vcmp.eq.f32.partialorder %v326, 0.0
    %v377 = vand.u32 %v326, 2147483648
    %v378 = vsel %vm376, %v377, %v375
    %v379 = vrsqrt.pop %v329
    %v380 = vmul.f32 %v379, %v329
    %v381 = vmul.f32 %v380, %v379
    %v382 = vmul.f32 0.5, %v381
    %v383 = vsub.f32 1.5, %v382
    %v384 = vmul.f32 %v379, %v383
    %v385 = vmul.f32 %v329, %v384
    %vm386 = vcmp.eq.f32.partialorder %v329, inf
    %v387 = vsel %vm386, %v329, %v385
    %vm388 = vcmp.eq.f32.partialorder %v329, 0.0
    %v389 = vand.u32 %v329, 2147483648
    %v390 = vsel %vm388, %v389, %v387
    %v391 = vrsqrt.pop %v332
    %v392 = vmul.f32 %v391, %v332
    %v393 = vmul.f32 %v392, %v391
    %v394 = vmul.f32 0.5, %v393
    %v395 = vsub.f32 1.5, %v394
    %v396 = vmul.f32 %v391, %v395
    %v397 = vmul.f32 %v332, %v396
    %vm398 = vcmp.eq.f32.partialorder %v332, inf
    %v399 = vsel %vm398, %v332, %v397
    %vm400 = vcmp.eq.f32.partialorder %v332, 0.0
    %v401 = vand.u32 %v332, 2147483648
    %v402 = vsel %vm400, %v401, %v399
    %v403 = vrsqrt.pop %v335
    %v404 = vmul.f32 %v403, %v335
    %v405 = vmul.f32 %v404, %v403
    %v406 = vmul.f32 0.5, %v405
    %v407 = vsub.f32 1.5, %v406
    %v408 = vmul.f32 %v403, %v407
    %v409 = vmul.f32 %v335, %v408
    %vm410 = vcmp.eq.f32.partialorder %v335, inf
    %v411 = vsel %vm410, %v335, %v409
    %vm412 = vcmp.eq.f32.partialorder %v335, 0.0
    %v413 = vand.u32 %v335, 2147483648
    %v414 = vsel %vm412, %v413, %v411
    %v415 = vrsqrt.pop %v338
    %v416 = vmul.f32 %v415, %v338
    %v417 = vmul.f32 %v416, %v415
    %v418 = vmul.f32 0.5, %v417
    %v419 = vsub.f32 1.5, %v418
    %v420 = vmul.f32 %v415, %v419
    %v421 = vmul.f32 %v338, %v420
    %vm422 = vcmp.eq.f32.partialorder %v338, inf
    %v423 = vsel %vm422, %v338, %v421
    %vm424 = vcmp.eq.f32.partialorder %v338, 0.0
    %v425 = vand.u32 %v338, 2147483648
    %v426 = vsel %vm424, %v425, %v423
    %v427 = vrsqrt.pop %v342
    %v428 = vmul.f32 %v427, %v342
    %v429 = vmul.f32 %v428, %v427
    %v430 = vmul.f32 0.5, %v429
    %v431 = vsub.f32 1.5, %v430
    %v432 = vmul.f32 %v427, %v431
    %v433 = vmul.f32 %v342, %v432
    %vm434 = vcmp.eq.f32.partialorder %v342, inf
    %v435 = vsel %vm434, %v342, %v433
    %vm436 = vcmp.eq.f32.partialorder %v342, 0.0
    %v437 = vand.u32 %v342, 2147483648
    %v438 = vsel %vm436, %v437, %v435
    %vm439 = vcmp.gt.f32.partialorder %v354, 1.0
    %vm440 = vcmp.gt.f32.partialorder %v366, 1.0
    %vm441 = vcmp.gt.f32.partialorder %v378, 1.0
    %vm442 = vcmp.gt.f32.partialorder %v390, 1.0
    %vm443 = vcmp.gt.f32.partialorder %v402, 1.0
    %vm444 = vcmp.gt.f32.partialorder %v414, 1.0
    %vm445 = vcmp.gt.f32.partialorder %v426, 1.0
    %vm446 = vcmp.gt.f32.partialorder %v438, 1.0
    %v447 = vadd.f32 %v354, 1e-07
    %v448 = vadd.f32 %v366, 1e-07
    %v449 = vadd.f32 %v378, 1e-07
    %v450 = vadd.f32 %v390, 1e-07
    %v451 = vadd.f32 %v402, 1e-07
    %v452 = vadd.f32 %v414, 1e-07
    %v453 = vadd.f32 %v426, 1e-07
    %v454 = vadd.f32 %v438, 1e-07
    %v455 = vrcp.pop %v447
    %v456 = vmul.f32 %v447, %v455
    %v457 = vsub.f32 1.0, %v456
    %v458 = vmul.f32 %v455, %v457
    %v459 = vadd.f32 %v455, %v458
    %vm460 = vweird.f32 %v447
    %vm461 = vweird.f32 %v455
    %vm462 = vmor %vm460, %vm461
    %v463 = vsel %vm462, %v455, %v459
    %v464 = vand.u32 2147483647, %v447
    %vm465 = vcmp.eq.f32.partialorder %v464, 8.507059e+37
    %v466 = vand.u32 %v447, 2147483648
    %v467 = vor.u32 1.1754944e-38, %v466
    %v468 = vsel %vm465, %v467, %v463
    %v469 = vmul.f32 1.0, %v468
    %v470 = vrcp.pop %v448
    %v471 = vmul.f32 %v448, %v470
    %v472 = vsub.f32 1.0, %v471
    %v473 = vmul.f32 %v470, %v472
    %v474 = vadd.f32 %v470, %v473
    %vm475 = vweird.f32 %v448
    %vm476 = vweird.f32 %v470
    %vm477 = vmor %vm475, %vm476
    %v478 = vsel %vm477, %v470, %v474
    %v479 = vand.u32 2147483647, %v448
    %vm480 = vcmp.eq.f32.partialorder %v479, 8.507059e+37
    %v481 = vand.u32 %v448, 2147483648
    %v482 = vor.u32 1.1754944e-38, %v481
    %v483 = vsel %vm480, %v482, %v478
    %v484 = vmul.f32 1.0, %v483
    %v485 = vrcp.pop %v449
    %v486 = vmul.f32 %v449, %v485
    %v487 = vsub.f32 1.0, %v486
    %v488 = vmul.f32 %v485, %v487
    %v489 = vadd.f32 %v485, %v488
    %vm490 = vweird.f32 %v449
    %vm491 = vweird.f32 %v485
    %vm492 = vmor %vm490, %vm491
    %v493 = vsel %vm492, %v485, %v489
    %v494 = vand.u32 2147483647, %v449
    %vm495 = vcmp.eq.f32.partialorder %v494, 8.507059e+37
    %v496 = vand.u32 %v449, 2147483648
    %v497 = vor.u32 1.1754944e-38, %v496
    %v498 = vsel %vm495, %v497, %v493
    %v499 = vmul.f32 1.0, %v498
    %v500 = vrcp.pop %v450
    %v501 = vmul.f32 %v450, %v500
    %v502 = vsub.f32 1.0, %v501
    %v503 = vmul.f32 %v500, %v502
    %v504 = vadd.f32 %v500, %v503
    %vm505 = vweird.f32 %v450
    %vm506 = vweird.f32 %v500
    %vm507 = vmor %vm505, %vm506
    %v508 = vsel %vm507, %v500, %v504
    %v509 = vand.u32 2147483647, %v450
    %vm510 = vcmp.eq.f32.partialorder %v509, 8.507059e+37
    %v511 = vand.u32 %v450, 2147483648
    %v512 = vor.u32 1.1754944e-38, %v511
    %v513 = vsel %vm510, %v512, %v508
    %v514 = vmul.f32 1.0, %v513
    %v515 = vrcp.pop %v451
    %v516 = vmul.f32 %v451, %v515
    %v517 = vsub.f32 1.0, %v516
    %v518 = vmul.f32 %v515, %v517
    %v519 = vadd.f32 %v515, %v518
    %vm520 = vweird.f32 %v451
    %vm521 = vweird.f32 %v515
    %vm522 = vmor %vm520, %vm521
    %v523 = vsel %vm522, %v515, %v519
    %v524 = vand.u32 2147483647, %v451
    %vm525 = vcmp.eq.f32.partialorder %v524, 8.507059e+37
    %v526 = vand.u32 %v451, 2147483648
    %v527 = vor.u32 1.1754944e-38, %v526
    %v528 = vsel %vm525, %v527, %v523
    %v529 = vmul.f32 1.0, %v528
    %v530 = vrcp.pop %v452
    %v531 = vmul.f32 %v452, %v530
    %v532 = vsub.f32 1.0, %v531
    %v533 = vmul.f32 %v530, %v532
    %v534 = vadd.f32 %v530, %v533
    %vm535 = vweird.f32 %v452
    %vm536 = vweird.f32 %v530
    %vm537 = vmor %vm535, %vm536
    %v538 = vsel %vm537, %v530, %v534
    %v539 = vand.u32 2147483647, %v452
    %vm540 = vcmp.eq.f32.partialorder %v539, 8.507059e+37
    %v541 = vand.u32 %v452, 2147483648
    %v542 = vor.u32 1.1754944e-38, %v541
    %v543 = vsel %vm540, %v542, %v538
    %v544 = vmul.f32 1.0, %v543
    %v545 = vrcp.pop %v453
    %v546 = vmul.f32 %v453, %v545
    %v547 = vsub.f32 1.0, %v546
    %v548 = vmul.f32 %v545, %v547
    %v549 = vadd.f32 %v545, %v548
    %vm550 = vweird.f32 %v453
    %vm551 = vweird.f32 %v545
    %vm552 = vmor %vm550, %vm551
    %v553 = vsel %vm552, %v545, %v549
    %v554 = vand.u32 2147483647, %v453
    %vm555 = vcmp.eq.f32.partialorder %v554, 8.507059e+37
    %v556 = vand.u32 %v453, 2147483648
    %v557 = vor.u32 1.1754944e-38, %v556
    %v558 = vsel %vm555, %v557, %v553
    %v559 = vmul.f32 1.0, %v558
    %v560 = vrcp.pop %v454
    %v561 = vmul.f32 %v454, %v560
    %v562 = vsub.f32 1.0, %v561
    %v563 = vmul.f32 %v560, %v562
    %v564 = vadd.f32 %v560, %v563
    %vm565 = vweird.f32 %v454
    %vm566 = vweird.f32 %v560
    %vm567 = vmor %vm565, %vm566
    %v568 = vsel %vm567, %v560, %v564
    %v569 = vand.u32 2147483647, %v454
    %vm570 = vcmp.eq.f32.partialorder %v569, 8.507059e+37
    %v571 = vand.u32 %v454, 2147483648
    %v572 = vor.u32 1.1754944e-38, %v571
    %v573 = vsel %vm570, %v572, %v568
    %v574 = vmul.f32 1.0, %v573
    %v575 = vsel %vm439, %v469, 1.0
    %v576 = vsel %vm440, %v484, 1.0
    %v577 = vsel %vm441, %v499, 1.0
    %v578 = vsel %vm442, %v514, 1.0
    %v579 = vsel %vm443, %v529, 1.0
    %v580 = vsel %vm444, %v544, 1.0
    %v581 = vsel %vm445, %v559, 1.0
    %v582 = vsel %vm446, %v574, 1.0
    %v583 = vmul.f32 %v302, %v575
    %v584 = vmul.f32 %v303, %v576
    %v585 = vmul.f32 %v304, %v577
    %v586 = vmul.f32 %v305, %v578
    %v587 = vmul.f32 %v306, %v579
    %v588 = vmul.f32 %v307, %v580
    %v589 = vmul.f32 %v308, %v581
    %v590 = vmul.f32 %v309, %v582
    %v591 = vld [vmem:[%s0] sm:$0xff]
    %v592 = vld [vmem:[%s0 + $0x8] sm:$0xff]
    %v593 = vlaneseq
    %v594 = vand.u32 %v593, 127
    %595 = vset.pattern.permute.xlu0 0
    %596 = vperm.xlu0 %595, %v591
    %v597 = vpop.permute.xlu0 %596
    %598 = vset.pattern.permute.xlu0 0
    %599 = vperm.xlu0 %598, %v592
    %v600 = vpop.permute.xlu0 %599
    %vm601 = vcmp.eq.s32.totalorder %v597, %v594
    %vm602 = vcmp.eq.s32.totalorder %v600, %v594
    %v603 = vsel %vm601, 1.0, 0.0
    %v604 = vsel %vm602, 1.0, 0.0
    %vm605 = vcmask 408576
    %v607 = vsel %vm605, %v603, 0
    %v610 = vsel %vm605, %v604, 0
    %vm612 = vcmask 1041408
    %v614 = vsel %vm612, %v301, 0
    %616 = vmatpush.msra.mxu0 0.0
    %617 = vmatpush.msra.mxu0 0.0
    %618 = vmatpush.msra.mxu0 0.0
    %619 = vmatpush.msra.mxu0 0.0
    %620 = vmatpush.msra.mxu0 0.0
    %621 = vmatpush.msra.mxu0 0.0
    %622 = vmatpush.msra.mxu0 0.0
    %623 = vmatpush.msra.mxu0 0.0
    %624 = vmatpush.msra.mxu0 0.0
    %625 = vmatpush.msra.mxu0 %v614
    %626 = vmatpush.msra.mxu0 %v300
    %627 = vmatpush.msra.mxu0 %v299
    %628 = vmatpush.msra.mxu0 %v298
    %629 = vmatpush.msra.mxu0 %v297
    %630 = vmatpush.msra.mxu0 %v296
    %631 = vmatpush.msra.mxu0 %v295
    %632 = vmatmul.f32.gmra.mxu0 %v607
    %v633 = vpop.f32.mrf.mxu0
    %v634 = vadd.f32 0.0, %v633
    %635 = vmatmul.f32.gmra.mxu0 %v610
    %v636 = vpop.f32.mrf.mxu0
    %v637 = vadd.f32 0.0, %v636
    %638 = vdwg.mxu0
    %v639 = vld [vmem:[%s1] sm:$0xff]
    %v640 = vld [vmem:[%s1 + $0x8] sm:$0xff]
    %v641 = vld [vmem:[%s1 + $0x10] sm:$0xff]
    %v642 = vld [vmem:[%s1 + $0x18] sm:$0xff]
    %v643 = vld [vmem:[%s1 + $0x20] sm:$0xff]
    %v644 = vld [vmem:[%s1 + $0x28] sm:$0xff]
    %v645 = vld [vmem:[%s1 + $0x30] sm:$0xff]
    %v646 = vld [vmem:[%s1 + $0x38] sm:$0xff]
    %647 = vset.pattern.permute.xlu0 0
    %648 = vperm.xlu0 %647, %v639
    %v649 = vpop.permute.xlu0 %648
    %650 = vset.pattern.permute.xlu0 0
    %651 = vperm.xlu0 %650, %v640
    %v652 = vpop.permute.xlu0 %651
    %653 = vset.pattern.permute.xlu0 0
    %654 = vperm.xlu0 %653, %v641
    %v655 = vpop.permute.xlu0 %654
    %656 = vset.pattern.permute.xlu0 0
    %657 = vperm.xlu0 %656, %v642
    %v658 = vpop.permute.xlu0 %657
    %659 = vset.pattern.permute.xlu0 0
    %660 = vperm.xlu0 %659, %v643
    %v661 = vpop.permute.xlu0 %660
    %662 = vset.pattern.permute.xlu0 0
    %663 = vperm.xlu0 %662, %v644
    %v664 = vpop.permute.xlu0 %663
    %665 = vset.pattern.permute.xlu0 0
    %666 = vperm.xlu0 %665, %v645
    %v667 = vpop.permute.xlu0 %666
    %668 = vset.pattern.permute.xlu0 0
    %669 = vperm.xlu0 %668, %v646
    %v670 = vpop.permute.xlu0 %669
    %vm671 = vcmp.eq.s32.totalorder %v649, %v594
    %vm672 = vcmp.eq.s32.totalorder %v652, %v594
    %vm673 = vcmp.eq.s32.totalorder %v655, %v594
    %vm674 = vcmp.eq.s32.totalorder %v658, %v594
    %vm675 = vcmp.eq.s32.totalorder %v661, %v594
    %vm676 = vcmp.eq.s32.totalorder %v664, %v594
    %vm677 = vcmp.eq.s32.totalorder %v667, %v594
    %vm678 = vcmp.eq.s32.totalorder %v670, %v594
    %v679 = vsel %vm671, 1.0, 0.0
    %v680 = vsel %vm672, 1.0, 0.0
    %v681 = vsel %vm673, 1.0, 0.0
    %v682 = vsel %vm674, 1.0, 0.0
    %v683 = vsel %vm675, 1.0, 0.0
    %v684 = vsel %vm676, 1.0, 0.0
    %v685 = vsel %vm677, 1.0, 0.0
    %v686 = vsel %vm678, 1.0, 0.0
    %v688 = vsel %vm605, %v679, 0
    %v691 = vsel %vm605, %v680, 0
    %v694 = vsel %vm605, %v681, 0
    %v697 = vsel %vm605, %v682, 0
    %v700 = vsel %vm605, %v683, 0
    %v703 = vsel %vm605, %v684, 0
    %v706 = vsel %vm605, %v685, 0
    %v709 = vsel %vm605, %v686, 0
    %711 = vmatpush.msra.mxu0 0.0
    %712 = vmatpush.msra.mxu0 0.0
    %713 = vmatpush.msra.mxu0 0.0
    %714 = vmatpush.msra.mxu0 0.0
    %715 = vmatpush.msra.mxu0 0.0
    %716 = vmatpush.msra.mxu0 0.0
    %717 = vmatpush.msra.mxu0 0.0
    %718 = vmatpush.msra.mxu0 0.0
    %719 = vmatpush.msra.mxu0 0.0
    %720 = vmatpush.msra.mxu0 %v614
    %721 = vmatpush.msra.mxu0 %v300
    %722 = vmatpush.msra.mxu0 %v299
    %723 = vmatpush.msra.mxu0 %v298
    %724 = vmatpush.msra.mxu0 %v297
    %725 = vmatpush.msra.mxu0 %v296
    %726 = vmatpush.msra.mxu0 %v295
    %727 = vmatmul.f32.gmra.mxu0 %v688
    %v728 = vpop.f32.mrf.mxu0
    %v729 = vadd.f32 0.0, %v728
    %730 = vmatmul.f32.gmra.mxu0 %v691
    %v731 = vpop.f32.mrf.mxu0
    %v732 = vadd.f32 0.0, %v731
    %733 = vmatmul.f32.gmra.mxu0 %v694
    %v734 = vpop.f32.mrf.mxu0
    %v735 = vadd.f32 0.0, %v734
    %736 = vmatmul.f32.gmra.mxu0 %v697
    %v737 = vpop.f32.mrf.mxu0
    %v738 = vadd.f32 0.0, %v737
    %739 = vmatmul.f32.gmra.mxu0 %v700
    %v740 = vpop.f32.mrf.mxu0
    %v741 = vadd.f32 0.0, %v740
    %742 = vmatmul.f32.gmra.mxu0 %v703
    %v743 = vpop.f32.mrf.mxu0
    %v744 = vadd.f32 0.0, %v743
    %745 = vmatmul.f32.gmra.mxu0 %v706
    %v746 = vpop.f32.mrf.mxu0
    %v747 = vadd.f32 0.0, %v746
    %748 = vmatmul.f32.gmra.mxu0 %v709
    %v749 = vpop.f32.mrf.mxu0
    %v750 = vadd.f32 0.0, %v749
    %751 = vdwg.mxu0
    %v752 = vsel %vm62, %v729, 0.0
    %v753 = vrot.slane %v752, 4
    %v754 = vadd.f32 %v752, %v753
    %v755 = vrot.slane %v754, 2
    %v756 = vadd.f32 %v754, %v755
    %v757 = vrot.slane %v756, 1
    %v758 = vadd.f32 %v756, %v757
    %v759 = vsel %vm62, %v732, 0.0
    %v760 = vrot.slane %v759, 4
    %v761 = vadd.f32 %v759, %v760
    %v762 = vrot.slane %v761, 2
    %v763 = vadd.f32 %v761, %v762
    %v764 = vrot.slane %v763, 1
    %v765 = vadd.f32 %v763, %v764
    %v766 = vsel %vm62, %v735, 0.0
    %v767 = vrot.slane %v766, 4
    %v768 = vadd.f32 %v766, %v767
    %v769 = vrot.slane %v768, 2
    %v770 = vadd.f32 %v768, %v769
    %v771 = vrot.slane %v770, 1
    %v772 = vadd.f32 %v770, %v771
    %v773 = vsel %vm62, %v738, 0.0
    %v774 = vrot.slane %v773, 4
    %v775 = vadd.f32 %v773, %v774
    %v776 = vrot.slane %v775, 2
    %v777 = vadd.f32 %v775, %v776
    %v778 = vrot.slane %v777, 1
    %v779 = vadd.f32 %v777, %v778
    %v780 = vsel %vm62, %v741, 0.0
    %v781 = vrot.slane %v780, 4
    %v782 = vadd.f32 %v780, %v781
    %v783 = vrot.slane %v782, 2
    %v784 = vadd.f32 %v782, %v783
    %v785 = vrot.slane %v784, 1
    %v786 = vadd.f32 %v784, %v785
    %v787 = vsel %vm62, %v744, 0.0
    %v788 = vrot.slane %v787, 4
    %v789 = vadd.f32 %v787, %v788
    %v790 = vrot.slane %v789, 2
    %v791 = vadd.f32 %v789, %v790
    %v792 = vrot.slane %v791, 1
    %v793 = vadd.f32 %v791, %v792
    %v794 = vsel %vm62, %v747, 0.0
    %v795 = vrot.slane %v794, 4
    %v796 = vadd.f32 %v794, %v795
    %v797 = vrot.slane %v796, 2
    %v798 = vadd.f32 %v796, %v797
    %v799 = vrot.slane %v798, 1
    %v800 = vadd.f32 %v798, %v799
    %v801 = vsel %vm62, %v750, 0.0
    %v802 = vrot.slane %v801, 4
    %v803 = vadd.f32 %v801, %v802
    %v804 = vrot.slane %v803, 2
    %v805 = vadd.f32 %v803, %v804
    %v806 = vrot.slane %v805, 1
    %v807 = vadd.f32 %v805, %v806
    %v808 = vld [vmem:[%s2] sm:$0xff]
    %v809 = vld [vmem:[%s2 + $0x8] sm:$0xff]
    %v810 = vld [vmem:[%s2 + $0x10] sm:$0xff]
    %v811 = vld [vmem:[%s2 + $0x18] sm:$0xff]
    %v812 = vld [vmem:[%s2 + $0x20] sm:$0xff]
    %v813 = vld [vmem:[%s2 + $0x28] sm:$0xff]
    %v814 = vld [vmem:[%s2 + $0x30] sm:$0xff]
    %v815 = vld [vmem:[%s2 + $0x38] sm:$0xff]
    %816 = vset.pattern.permute.xlu0 0
    %817 = vperm.xlu0 %816, %v808
    %v818 = vpop.permute.xlu0 %817
    %819 = vset.pattern.permute.xlu0 0
    %820 = vperm.xlu0 %819, %v809
    %v821 = vpop.permute.xlu0 %820
    %822 = vset.pattern.permute.xlu0 0
    %823 = vperm.xlu0 %822, %v810
    %v824 = vpop.permute.xlu0 %823
    %825 = vset.pattern.permute.xlu0 0
    %826 = vperm.xlu0 %825, %v811
    %v827 = vpop.permute.xlu0 %826
    %828 = vset.pattern.permute.xlu0 0
    %829 = vperm.xlu0 %828, %v812
    %v830 = vpop.permute.xlu0 %829
    %831 = vset.pattern.permute.xlu0 0
    %832 = vperm.xlu0 %831, %v813
    %v833 = vpop.permute.xlu0 %832
    %834 = vset.pattern.permute.xlu0 0
    %835 = vperm.xlu0 %834, %v814
    %v836 = vpop.permute.xlu0 %835
    %837 = vset.pattern.permute.xlu0 0
    %838 = vperm.xlu0 %837, %v815
    %v839 = vpop.permute.xlu0 %838
    %vm840 = vcmp.eq.s32.totalorder %v818, %v594
    %vm841 = vcmp.eq.s32.totalorder %v821, %v594
    %vm842 = vcmp.eq.s32.totalorder %v824, %v594
    %vm843 = vcmp.eq.s32.totalorder %v827, %v594
    %vm844 = vcmp.eq.s32.totalorder %v830, %v594
    %vm845 = vcmp.eq.s32.totalorder %v833, %v594
    %vm846 = vcmp.eq.s32.totalorder %v836, %v594
    %vm847 = vcmp.eq.s32.totalorder %v839, %v594
    %v848 = vsel %vm840, 1.0, 0.0
    %v849 = vsel %vm841, 1.0, 0.0
    %v850 = vsel %vm842, 1.0, 0.0
    %v851 = vsel %vm843, 1.0, 0.0
    %v852 = vsel %vm844, 1.0, 0.0
    %v853 = vsel %vm845, 1.0, 0.0
    %v854 = vsel %vm846, 1.0, 0.0
    %v855 = vsel %vm847, 1.0, 0.0
    %v857 = vsel %vm605, %v848, 0
    %v860 = vsel %vm605, %v849, 0
    %v863 = vsel %vm605, %v850, 0
    %v866 = vsel %vm605, %v851, 0
    %v869 = vsel %vm605, %v852, 0
    %v872 = vsel %vm605, %v853, 0
    %v875 = vsel %vm605, %v854, 0
    %v878 = vsel %vm605, %v855, 0
    %880 = vmatpush.msra.mxu0 0.0
    %881 = vmatpush.msra.mxu0 0.0
    %882 = vmatpush.msra.mxu0 0.0
    %883 = vmatpush.msra.mxu0 0.0
    %884 = vmatpush.msra.mxu0 0.0
    %885 = vmatpush.msra.mxu0 0.0
    %886 = vmatpush.msra.mxu0 0.0
    %887 = vmatpush.msra.mxu0 0.0
    %888 = vmatpush.msra.mxu0 0.0
    %889 = vmatpush.msra.mxu0 %v614
    %890 = vmatpush.msra.mxu0 %v300
    %891 = vmatpush.msra.mxu0 %v299
    %892 = vmatpush.msra.mxu0 %v298
    %893 = vmatpush.msra.mxu0 %v297
    %894 = vmatpush.msra.mxu0 %v296
    %895 = vmatpush.msra.mxu0 %v295
    %896 = vmatmul.f32.gmra.mxu0 %v857
    %v897 = vpop.f32.mrf.mxu0
    %v898 = vadd.f32 0.0, %v897
    %899 = vmatmul.f32.gmra.mxu0 %v860
    %v900 = vpop.f32.mrf.mxu0
    %v901 = vadd.f32 0.0, %v900
    %902 = vmatmul.f32.gmra.mxu0 %v863
    %v903 = vpop.f32.mrf.mxu0
    %v904 = vadd.f32 0.0, %v903
    %905 = vmatmul.f32.gmra.mxu0 %v866
    %v906 = vpop.f32.mrf.mxu0
    %v907 = vadd.f32 0.0, %v906
    %908 = vmatmul.f32.gmra.mxu0 %v869
    %v909 = vpop.f32.mrf.mxu0
    %v910 = vadd.f32 0.0, %v909
    %911 = vmatmul.f32.gmra.mxu0 %v872
    %v912 = vpop.f32.mrf.mxu0
    %v913 = vadd.f32 0.0, %v912
    %914 = vmatmul.f32.gmra.mxu0 %v875
    %v915 = vpop.f32.mrf.mxu0
    %v916 = vadd.f32 0.0, %v915
    %917 = vmatmul.f32.gmra.mxu0 %v878
    %v918 = vpop.f32.mrf.mxu0
    %v919 = vadd.f32 0.0, %v918
    %920 = vdwg.mxu0
    %v921 = vsel %vm62, %v898, 0.0
    %v922 = vrot.slane %v921, 4
    %v923 = vadd.f32 %v921, %v922
    %v924 = vrot.slane %v923, 2
    %v925 = vadd.f32 %v923, %v924
    %v926 = vrot.slane %v925, 1
    %v927 = vadd.f32 %v925, %v926
    %v928 = vsel %vm62, %v901, 0.0
    %v929 = vrot.slane %v928, 4
    %v930 = vadd.f32 %v928, %v929
    %v931 = vrot.slane %v930, 2
    %v932 = vadd.f32 %v930, %v931
    %v933 = vrot.slane %v932, 1
    %v934 = vadd.f32 %v932, %v933
    %v935 = vsel %vm62, %v904, 0.0
    %v936 = vrot.slane %v935, 4
    %v937 = vadd.f32 %v935, %v936
    %v938 = vrot.slane %v937, 2
    %v939 = vadd.f32 %v937, %v938
    %v940 = vrot.slane %v939, 1
    %v941 = vadd.f32 %v939, %v940
    %v942 = vsel %vm62, %v907, 0.0
    %v943 = vrot.slane %v942, 4
    %v944 = vadd.f32 %v942, %v943
    %v945 = vrot.slane %v944, 2
    %v946 = vadd.f32 %v944, %v945
    %v947 = vrot.slane %v946, 1
    %v948 = vadd.f32 %v946, %v947
    %v949 = vsel %vm62, %v910, 0.0
    %v950 = vrot.slane %v949, 4
    %v951 = vadd.f32 %v949, %v950
    %v952 = vrot.slane %v951, 2
    %v953 = vadd.f32 %v951, %v952
    %v954 = vrot.slane %v953, 1
    %v955 = vadd.f32 %v953, %v954
    %v956 = vsel %vm62, %v913, 0.0
    %v957 = vrot.slane %v956, 4
    %v958 = vadd.f32 %v956, %v957
    %v959 = vrot.slane %v958, 2
    %v960 = vadd.f32 %v958, %v959
    %v961 = vrot.slane %v960, 1
    %v962 = vadd.f32 %v960, %v961
    %v963 = vsel %vm62, %v916, 0.0
    %v964 = vrot.slane %v963, 4
    %v965 = vadd.f32 %v963, %v964
    %v966 = vrot.slane %v965, 2
    %v967 = vadd.f32 %v965, %v966
    %v968 = vrot.slane %v967, 1
    %v969 = vadd.f32 %v967, %v968
    %v970 = vsel %vm62, %v919, 0.0
    %v971 = vrot.slane %v970, 4
    %v972 = vadd.f32 %v970, %v971
    %v973 = vrot.slane %v972, 2
    %v974 = vadd.f32 %v972, %v973
    %v975 = vrot.slane %v974, 1
    %v976 = vadd.f32 %v974, %v975
    %v977 = vld [vmem:[%s3] sm:$0xff]
    %v978 = vld [vmem:[%s3 + $0x8] sm:$0xff]
    %v979 = vld [vmem:[%s3 + $0x10] sm:$0xff]
    %v980 = vld [vmem:[%s3 + $0x18] sm:$0xff]
    %v981 = vld [vmem:[%s3 + $0x20] sm:$0xff]
    %v982 = vld [vmem:[%s3 + $0x28] sm:$0xff]
    %v983 = vld [vmem:[%s3 + $0x30] sm:$0xff]
    %v984 = vld [vmem:[%s3 + $0x38] sm:$0xff]
    %985 = vset.pattern.permute.xlu0 0
    %986 = vperm.xlu0 %985, %v977
    %v987 = vpop.permute.xlu0 %986
    %988 = vset.pattern.permute.xlu0 0
    %989 = vperm.xlu0 %988, %v978
    %v990 = vpop.permute.xlu0 %989
    %991 = vset.pattern.permute.xlu0 0
    %992 = vperm.xlu0 %991, %v979
    %v993 = vpop.permute.xlu0 %992
    %994 = vset.pattern.permute.xlu0 0
    %995 = vperm.xlu0 %994, %v980
    %v996 = vpop.permute.xlu0 %995
    %997 = vset.pattern.permute.xlu0 0
    %998 = vperm.xlu0 %997, %v981
    %v999 = vpop.permute.xlu0 %998
    %1000 = vset.pattern.permute.xlu0 0
    %1001 = vperm.xlu0 %1000, %v982
    %v1002 = vpop.permute.xlu0 %1001
    %1003 = vset.pattern.permute.xlu0 0
    %1004 = vperm.xlu0 %1003, %v983
    %v1005 = vpop.permute.xlu0 %1004
    %1006 = vset.pattern.permute.xlu0 0
    %1007 = vperm.xlu0 %1006, %v984
    %v1008 = vpop.permute.xlu0 %1007
    %vm1009 = vcmp.eq.s32.totalorder %v987, %v594
    %vm1010 = vcmp.eq.s32.totalorder %v990, %v594
    %vm1011 = vcmp.eq.s32.totalorder %v993, %v594
    %vm1012 = vcmp.eq.s32.totalorder %v996, %v594
    %vm1013 = vcmp.eq.s32.totalorder %v999, %v594
    %vm1014 = vcmp.eq.s32.totalorder %v1002, %v594
    %vm1015 = vcmp.eq.s32.totalorder %v1005, %v594
    %vm1016 = vcmp.eq.s32.totalorder %v1008, %v594
    %v1017 = vsel %vm1009, 1.0, 0.0
    %v1018 = vsel %vm1010, 1.0, 0.0
    %v1019 = vsel %vm1011, 1.0, 0.0
    %v1020 = vsel %vm1012, 1.0, 0.0
    %v1021 = vsel %vm1013, 1.0, 0.0
    %v1022 = vsel %vm1014, 1.0, 0.0
    %v1023 = vsel %vm1015, 1.0, 0.0
    %v1024 = vsel %vm1016, 1.0, 0.0
    %vm1025 = vcmask 490496
    %v1027 = vsel %vm1025, %v1017, 0
    %v1030 = vsel %vm1025, %v1018, 0
    %v1033 = vsel %vm1025, %v1019, 0
    %v1036 = vsel %vm1025, %v1020, 0
    %v1039 = vsel %vm1025, %v1021, 0
    %v1042 = vsel %vm1025, %v1022, 0
    %v1045 = vsel %vm1025, %v1023, 0
    %v1048 = vsel %vm1025, %v1024, 0
    %vm1050 = vcmask 1043456
    %v1052 = vsel %vm1050, %v590, 0
    %1054 = vmatpush.msra.mxu0 0.0
    %1055 = vmatpush.msra.mxu0 0.0
    %1056 = vmatpush.msra.mxu0 0.0
    %1057 = vmatpush.msra.mxu0 0.0
    %1058 = vmatpush.msra.mxu0 0.0
    %1059 = vmatpush.msra.mxu0 0.0
    %1060 = vmatpush.msra.mxu0 0.0
    %1061 = vmatpush.msra.mxu0 0.0
    %1062 = vmatpush.msra.mxu0 %v1052
    %1063 = vmatpush.msra.mxu0 %v589
    %1064 = vmatpush.msra.mxu0 %v588
    %1065 = vmatpush.msra.mxu0 %v587
    %1066 = vmatpush.msra.mxu0 %v586
    %1067 = vmatpush.msra.mxu0 %v585
    %1068 = vmatpush.msra.mxu0 %v584
    %1069 = vmatpush.msra.mxu0 %v583
    %1070 = vmatmul.f32.gmra.mxu0 %v1027
    %v1071 = vpop.f32.mrf.mxu0
    %v1072 = vadd.f32 0.0, %v1071
    %1073 = vmatmul.f32.gmra.mxu0 %v1030
    %v1074 = vpop.f32.mrf.mxu0
    %v1075 = vadd.f32 0.0, %v1074
    %1076 = vmatmul.f32.gmra.mxu0 %v1033
    %v1077 = vpop.f32.mrf.mxu0
    %v1078 = vadd.f32 0.0, %v1077
    %1079 = vmatmul.f32.gmra.mxu0 %v1036
    %v1080 = vpop.f32.mrf.mxu0
    %v1081 = vadd.f32 0.0, %v1080
    %1082 = vmatmul.f32.gmra.mxu0 %v1039
    %v1083 = vpop.f32.mrf.mxu0
    %v1084 = vadd.f32 0.0, %v1083
    %1085 = vmatmul.f32.gmra.mxu0 %v1042
    %v1086 = vpop.f32.mrf.mxu0
    %v1087 = vadd.f32 0.0, %v1086
    %1088 = vmatmul.f32.gmra.mxu0 %v1045
    %v1089 = vpop.f32.mrf.mxu0
    %v1090 = vadd.f32 0.0, %v1089
    %1091 = vmatmul.f32.gmra.mxu0 %v1048
    %v1092 = vpop.f32.mrf.mxu0
    %v1093 = vadd.f32 0.0, %v1092
    %1094 = vdwg.mxu0
    %v1095 = vadd.s32 %v594, 128
    %vm1096 = vcmp.lt.s32.totalorder %v594, 0
    %v1097 = vsub.s32 0, %v594
    %v1098 = vsel %vm1096, %v1097, %v594
    %v1099 = vshrl.u32 %v1098, 6
    %v1100 = vand.u32 %v1098, 63
    %v1101 = vsub.s32 0, %v1100
    %v1102 = vsel %vm1096, %v1101, %v1100
    %vm1103 = vcmp.lt.s32.totalorder %v1095, 0
    %v1104 = vsub.s32 0, %v1095
    %v1105 = vsel %vm1103, %v1104, %v1095
    %v1106 = vshrl.u32 %v1105, 6
    %v1107 = vand.u32 %v1105, 63
    %v1108 = vsub.s32 0, %v1107
    %v1109 = vsel %vm1103, %v1108, %v1107
    %vm1110 = vcmp.ne.s32.totalorder %v1102, 0
    %vm1111 = vcmp.ne.s32.totalorder %v1109, 0
    %vm1112 = vcmp.lt.s32.totalorder %v1102, 0
    %vm1113 = vcmp.lt.s32.totalorder %v1109, 0
    %vm1114 = vmand %vm1112, %vm1110
    %vm1115 = vmand %vm1113, %vm1111
    %v1116 = vadd.s32 %v1102, 64
    %v1117 = vadd.s32 %v1109, 64
    %v1118 = vsel %vm1114, %v1116, %v1102
    %v1119 = vsel %vm1115, %v1117, %v1109
    %vm1120 = vcmp.lt.s32.totalorder %v1118, 32
    %vm1121 = vcmp.lt.s32.totalorder %v1119, 32
    %vm1122 = vcmp.ge.s32.totalorder %v594, 64
    %v1123 = vld [vmem:[%s10] sm:$0xff]
    %v1124 = vld [vmem:[%s10 + $0x8] sm:$0xff]
    %v1125 = vld [vmem:[%s10 + $0x10] sm:$0xff]
    %v1126 = vld [vmem:[%s10 + $0x18] sm:$0xff]
    %v1127 = vld [vmem:[%s10 + $0x20] sm:$0xff]
    %v1128 = vld [vmem:[%s10 + $0x28] sm:$0xff]
    %v1129 = vld [vmem:[%s10 + $0x30] sm:$0xff]
    %v1130 = vld [vmem:[%s10 + $0x38] sm:$0xff]
    %v1131 = vld [vmem:[%s11] sm:$0xff]
    %v1132 = vld [vmem:[%s11 + $0x8] sm:$0xff]
    %v1133 = vld [vmem:[%s11 + $0x10] sm:$0xff]
    %v1134 = vld [vmem:[%s11 + $0x18] sm:$0xff]
    %v1135 = vld [vmem:[%s11 + $0x20] sm:$0xff]
    %v1136 = vld [vmem:[%s11 + $0x28] sm:$0xff]
    %v1137 = vld [vmem:[%s11 + $0x30] sm:$0xff]
    %v1138 = vld [vmem:[%s11 + $0x38] sm:$0xff]
    %v1139 = vld [vmem:[%s11 + $0x40] sm:$0xff]
    %v1140 = vld [vmem:[%s11 + $0x48] sm:$0xff]
    %v1141 = vld [vmem:[%s11 + $0x50] sm:$0xff]
    %v1142 = vld [vmem:[%s11 + $0x58] sm:$0xff]
    %v1143 = vld [vmem:[%s11 + $0x60] sm:$0xff]
    %v1144 = vld [vmem:[%s11 + $0x68] sm:$0xff]
    %v1145 = vld [vmem:[%s11 + $0x70] sm:$0xff]
    %v1146 = vld [vmem:[%s11 + $0x78] sm:$0xff]
    %v1147 = vld [vmem:[%s12] sm:$0x3]
    %v1149 = vperm.slane %v1147, 0
    %v1150 = vperm.slane %v1147, 1
    %v1154 = vsel %vm62, %v1072, 0
    %v1157 = vsel %vm62, %v1075, 0
    %v1160 = vsel %vm62, %v1078, 0
    %v1163 = vsel %vm62, %v1081, 0
    %v1166 = vsel %vm62, %v1084, 0
    %v1169 = vsel %vm62, %v1087, 0
    %v1172 = vsel %vm62, %v1090, 0
    %v1175 = vsel %vm62, %v1093, 0
    %1177 = vmatpush.msra.mxu0 0.0
    %1178 = vmatpush.msra.mxu0 0.0
    %1179 = vmatpush.msra.mxu0 0.0
    %1180 = vmatpush.msra.mxu0 0.0
    %1181 = vmatpush.msra.mxu0 0.0
    %1182 = vmatpush.msra.mxu0 0.0
    %1183 = vmatpush.msra.mxu0 0.0
    %1184 = vmatpush.msra.mxu0 0.0
    %1185 = vmatpush.msra.mxu0 0.0
    %1186 = vmatpush.msra.mxu0 0.0
    %1187 = vmatpush.msra.mxu0 0.0
    %1188 = vmatpush.msra.mxu0 0.0
    %1189 = vmatpush.msra.mxu0 %v1129
    %1190 = vmatpush.msra.mxu0 %v1127
    %1191 = vmatpush.msra.mxu0 %v1125
    %1192 = vmatpush.msra.mxu0 %v1123
    %1193 = vmatmul.f32.gmra.mxu0 %v1154
    %v1194 = vpop.f32.mrf.mxu0
    %v1195 = vadd.f32 %v1149, %v1194
    %1196 = vmatmul.f32.gmra.mxu0 %v1157
    %v1197 = vpop.f32.mrf.mxu0
    %v1198 = vadd.f32 %v1149, %v1197
    %1199 = vmatmul.f32.gmra.mxu0 %v1160
    %v1200 = vpop.f32.mrf.mxu0
    %v1201 = vadd.f32 %v1149, %v1200
    %1202 = vmatmul.f32.gmra.mxu0 %v1163
    %v1203 = vpop.f32.mrf.mxu0
    %v1204 = vadd.f32 %v1149, %v1203
    %1205 = vmatmul.f32.gmra.mxu0 %v1166
    %v1206 = vpop.f32.mrf.mxu0
    %v1207 = vadd.f32 %v1149, %v1206
    %1208 = vmatmul.f32.gmra.mxu0 %v1169
    %v1209 = vpop.f32.mrf.mxu0
    %v1210 = vadd.f32 %v1149, %v1209
    %1211 = vmatmul.f32.gmra.mxu0 %v1172
    %v1212 = vpop.f32.mrf.mxu0
    %v1213 = vadd.f32 %v1149, %v1212
    %1214 = vmatmul.f32.gmra.mxu0 %v1175
    %v1215 = vpop.f32.mrf.mxu0
    %v1216 = vadd.f32 %v1149, %v1215
    %1217 = vdwg.mxu0
    %1218 = vmatpush.msra.mxu0 0.0
    %1219 = vmatpush.msra.mxu0 0.0
    %1220 = vmatpush.msra.mxu0 0.0
    %1221 = vmatpush.msra.mxu0 0.0
    %1222 = vmatpush.msra.mxu0 0.0
    %1223 = vmatpush.msra.mxu0 0.0
    %1224 = vmatpush.msra.mxu0 0.0
    %1225 = vmatpush.msra.mxu0 0.0
    %1226 = vmatpush.msra.mxu0 0.0
    %1227 = vmatpush.msra.mxu0 0.0
    %1228 = vmatpush.msra.mxu0 0.0
    %1229 = vmatpush.msra.mxu0 0.0
    %1230 = vmatpush.msra.mxu0 %v1130
    %1231 = vmatpush.msra.mxu0 %v1128
    %1232 = vmatpush.msra.mxu0 %v1126
    %1233 = vmatpush.msra.mxu0 %v1124
    %1234 = vmatmul.f32.gmra.mxu0 %v1154
    %v1235 = vpop.f32.mrf.mxu0
    %v1236 = vadd.f32 %v1150, %v1235
    %1237 = vmatmul.f32.gmra.mxu0 %v1157
    %v1238 = vpop.f32.mrf.mxu0
    %v1239 = vadd.f32 %v1150, %v1238
    %1240 = vmatmul.f32.gmra.mxu0 %v1160
    %v1241 = vpop.f32.mrf.mxu0
    %v1242 = vadd.f32 %v1150, %v1241
    %1243 = vmatmul.f32.gmra.mxu0 %v1163
    %v1244 = vpop.f32.mrf.mxu0
    %v1245 = vadd.f32 %v1150, %v1244
    %1246 = vmatmul.f32.gmra.mxu0 %v1166
    %v1247 = vpop.f32.mrf.mxu0
    %v1248 = vadd.f32 %v1150, %v1247
    %1249 = vmatmul.f32.gmra.mxu0 %v1169
    %v1250 = vpop.f32.mrf.mxu0
    %v1251 = vadd.f32 %v1150, %v1250
    %1252 = vmatmul.f32.gmra.mxu0 %v1172
    %v1253 = vpop.f32.mrf.mxu0
    %v1254 = vadd.f32 %v1150, %v1253
    %1255 = vmatmul.f32.gmra.mxu0 %v1175
    %v1256 = vpop.f32.mrf.mxu0
    %v1257 = vadd.f32 %v1150, %v1256
    %1258 = vdwg.mxu0
    %v1259 = vsel %vm1120, %v1195, %v1216
    %v1260 = vsel %vm1121, %v1236, %v1257
    %vm1261 = vcmask 523264
    %v1263 = vsel %vm1261, 0.0, 0
    %1265 = vmatpush.msra.mxu0 0.0
    %1266 = vmatpush.msra.mxu0 0.0
    %1267 = vmatpush.msra.mxu0 0.0
    %1268 = vmatpush.msra.mxu0 0.0
    %1269 = vmatpush.msra.mxu0 0.0
    %1270 = vmatpush.msra.mxu0 0.0
    %1271 = vmatpush.msra.mxu0 0.0
    %1272 = vmatpush.msra.mxu0 0.0
    %1273 = vmatpush.msra.mxu0 %v1145
    %1274 = vmatpush.msra.mxu0 %v1143
    %1275 = vmatpush.msra.mxu0 %v1141
    %1276 = vmatpush.msra.mxu0 %v1139
    %1277 = vmatpush.msra.mxu0 %v1137
    %1278 = vmatpush.msra.mxu0 %v1135
    %1279 = vmatpush.msra.mxu0 %v1133
    %1280 = vmatpush.msra.mxu0 %v1131
    %1281 = vmatmul.f32.gmra.mxu0 %v1263
    %v1282 = vpop.f32.mrf.mxu0
    %v1283 = vadd.f32 0.0, %v1282
    %1284 = vdwg.mxu0
    %1285 = vmatpush.msra.mxu0 0.0
    %1286 = vmatpush.msra.mxu0 0.0
    %1287 = vmatpush.msra.mxu0 0.0
    %1288 = vmatpush.msra.mxu0 0.0
    %1289 = vmatpush.msra.mxu0 0.0
    %1290 = vmatpush.msra.mxu0 0.0
    %1291 = vmatpush.msra.mxu0 0.0
    %1292 = vmatpush.msra.mxu0 0.0
    %1293 = vmatpush.msra.mxu0 %v1146
    %1294 = vmatpush.msra.mxu0 %v1144
    %1295 = vmatpush.msra.mxu0 %v1142
    %1296 = vmatpush.msra.mxu0 %v1140
    %1297 = vmatpush.msra.mxu0 %v1138
    %1298 = vmatpush.msra.mxu0 %v1136
    %1299 = vmatpush.msra.mxu0 %v1134
    %1300 = vmatpush.msra.mxu0 %v1132
    %1301 = vmatmul.f32.gmra.mxu0 %v1263
    %v1302 = vpop.f32.mrf.mxu0
    %v1303 = vadd.f32 0.0, %v1302
    %1304 = vdwg.mxu0
    %v1305 = vadd.f32 %v1259, %v1283
    %v1306 = vadd.f32 %v1260, %v1303
    %v1307 = vxor.u32 %v1305, 2147483648
    %v1308 = vxor.u32 %v1306, 2147483648
    %v1309 = vmul.f32 %v1307, 1.442695
    %v1310 = vpow.pop %v1309
    %v1311 = vmul.f32 %v1308, 1.442695
    %v1312 = vpow.pop %v1311
    %v1313 = vadd.f32 %v1310, 1.0
    %v1314 = vadd.f32 %v1312, 1.0
    %v1315 = vrcp.pop %v1313
    %v1316 = vmul.f32 %v1313, %v1315
    %v1317 = vsub.f32 1.0, %v1316
    %v1318 = vmul.f32 %v1315, %v1317
    %v1319 = vadd.f32 %v1315, %v1318
    %vm1320 = vweird.f32 %v1313
    %vm1321 = vweird.f32 %v1315
    %vm1322 = vmor %vm1320, %vm1321
    %v1323 = vsel %vm1322, %v1315, %v1319
    %v1324 = vand.u32 2147483647, %v1313
    %vm1325 = vcmp.eq.f32.partialorder %v1324, 8.507059e+37
    %v1326 = vand.u32 %v1313, 2147483648
    %v1327 = vor.u32 1.1754944e-38, %v1326
    %v1328 = vsel %vm1325, %v1327, %v1323
    %v1329 = vmul.f32 1.0, %v1328
    %v1330 = vrcp.pop %v1314
    %v1331 = vmul.f32 %v1314, %v1330
    %v1332 = vsub.f32 1.0, %v1331
    %v1333 = vmul.f32 %v1330, %v1332
    %v1334 = vadd.f32 %v1330, %v1333
    %vm1335 = vweird.f32 %v1314
    %vm1336 = vweird.f32 %v1330
    %vm1337 = vmor %vm1335, %vm1336
    %v1338 = vsel %vm1337, %v1330, %v1334
    %v1339 = vand.u32 2147483647, %v1314
    %vm1340 = vcmp.eq.f32.partialorder %v1339, 8.507059e+37
    %v1341 = vand.u32 %v1314, 2147483648
    %v1342 = vor.u32 1.1754944e-38, %v1341
    %v1343 = vsel %vm1340, %v1342, %v1338
    %v1344 = vmul.f32 1.0, %v1343
    %v1345 = vtanh.pop %v1306
    %v1346 = vsel %vm1122, %v1345, %v1344
    %v1347 = vmul.f32 %v1329, 0.0
    %1349 = vrot.lane.b32.xlu0 %v1346, 64
    %v1350 = vpop.permute.xlu0 %1349
    %v1352 = vmul.f32 %v1329, %v1350
    %1354 = vrot.lane.b32.xlu0 %v1352, 64
    %v1355 = vpop.permute.xlu0 %1354
    %v1357 = vadd.f32 %v1347, %v1355
    %v1358 = vtanh.pop %v1357
    %1360 = vrot.lane.b32.xlu0 %v1358, 64
    %v1361 = vpop.permute.xlu0 %1360
    %v1363 = vmul.f32 %v1346, %v1361
    %v1364 = vsel %vm1120, %v1198, %v1213
    %v1365 = vsel %vm1121, %v1239, %v1254
    %v1367 = vsel %vm1261, %v1363, 0
    %1369 = vmatpush.msra.mxu0 0.0
    %1370 = vmatpush.msra.mxu0 0.0
    %1371 = vmatpush.msra.mxu0 0.0
    %1372 = vmatpush.msra.mxu0 0.0
    %1373 = vmatpush.msra.mxu0 0.0
    %1374 = vmatpush.msra.mxu0 0.0
    %1375 = vmatpush.msra.mxu0 0.0
    %1376 = vmatpush.msra.mxu0 0.0
    %1377 = vmatpush.msra.mxu0 %v1145
    %1378 = vmatpush.msra.mxu0 %v1143
    %1379 = vmatpush.msra.mxu0 %v1141
    %1380 = vmatpush.msra.mxu0 %v1139
    %1381 = vmatpush.msra.mxu0 %v1137
    %1382 = vmatpush.msra.mxu0 %v1135
    %1383 = vmatpush.msra.mxu0 %v1133
    %1384 = vmatpush.msra.mxu0 %v1131
    %1385 = vmatmul.f32.gmra.mxu0 %v1367
    %v1386 = vpop.f32.mrf.mxu0
    %v1387 = vadd.f32 0.0, %v1386
    %1388 = vdwg.mxu0
    %1389 = vmatpush.msra.mxu0 0.0
    %1390 = vmatpush.msra.mxu0 0.0
    %1391 = vmatpush.msra.mxu0 0.0
    %1392 = vmatpush.msra.mxu0 0.0
    %1393 = vmatpush.msra.mxu0 0.0
    %1394 = vmatpush.msra.mxu0 0.0
    %1395 = vmatpush.msra.mxu0 0.0
    %1396 = vmatpush.msra.mxu0 0.0
    %1397 = vmatpush.msra.mxu0 %v1146
    %1398 = vmatpush.msra.mxu0 %v1144
    %1399 = vmatpush.msra.mxu0 %v1142
    %1400 = vmatpush.msra.mxu0 %v1140
    %1401 = vmatpush.msra.mxu0 %v1138
    %1402 = vmatpush.msra.mxu0 %v1136
    %1403 = vmatpush.msra.mxu0 %v1134
    %1404 = vmatpush.msra.mxu0 %v1132
    %1405 = vmatmul.f32.gmra.mxu0 %v1367
    %v1406 = vpop.f32.mrf.mxu0
    %v1407 = vadd.f32 0.0, %v1406
    %1408 = vdwg.mxu0
    %v1409 = vadd.f32 %v1364, %v1387
    %v1410 = vadd.f32 %v1365, %v1407
    %v1411 = vxor.u32 %v1409, 2147483648
    %v1412 = vxor.u32 %v1410, 2147483648
    %v1413 = vmul.f32 %v1411, 1.442695
    %v1414 = vpow.pop %v1413
    %v1415 = vmul.f32 %v1412, 1.442695
    %v1416 = vpow.pop %v1415
    %v1417 = vadd.f32 %v1414, 1.0
    %v1418 = vadd.f32 %v1416, 1.0
    %v1419 = vrcp.pop %v1417
    %v1420 = vmul.f32 %v1417, %v1419
    %v1421 = vsub.f32 1.0, %v1420
    %v1422 = vmul.f32 %v1419, %v1421
    %v1423 = vadd.f32 %v1419, %v1422
    %vm1424 = vweird.f32 %v1417
    %vm1425 = vweird.f32 %v1419
    %vm1426 = vmor %vm1424, %vm1425
    %v1427 = vsel %vm1426, %v1419, %v1423
    %v1428 = vand.u32 2147483647, %v1417
    %vm1429 = vcmp.eq.f32.partialorder %v1428, 8.507059e+37
    %v1430 = vand.u32 %v1417, 2147483648
    %v1431 = vor.u32 1.1754944e-38, %v1430
    %v1432 = vsel %vm1429, %v1431, %v1427
    %v1433 = vmul.f32 1.0, %v1432
    %v1434 = vrcp.pop %v1418
    %v1435 = vmul.f32 %v1418, %v1434
    %v1436 = vsub.f32 1.0, %v1435
    %v1437 = vmul.f32 %v1434, %v1436
    %v1438 = vadd.f32 %v1434, %v1437
    %vm1439 = vweird.f32 %v1418
    %vm1440 = vweird.f32 %v1434
    %vm1441 = vmor %vm1439, %vm1440
    %v1442 = vsel %vm1441, %v1434, %v1438
    %v1443 = vand.u32 2147483647, %v1418
    %vm1444 = vcmp.eq.f32.partialorder %v1443, 8.507059e+37
    %v1445 = vand.u32 %v1418, 2147483648
    %v1446 = vor.u32 1.1754944e-38, %v1445
    %v1447 = vsel %vm1444, %v1446, %v1442
    %v1448 = vmul.f32 1.0, %v1447
    %v1449 = vtanh.pop %v1410
    %v1450 = vsel %vm1122, %v1449, %v1448
    %v1451 = vmul.f32 %v1433, %v1357
    %1453 = vrot.lane.b32.xlu0 %v1450, 64
    %v1454 = vpop.permute.xlu0 %1453
    %v1456 = vmul.f32 %v1433, %v1454
    %1458 = vrot.lane.b32.xlu0 %v1456, 64
    %v1459 = vpop.permute.xlu0 %1458
    %v1461 = vadd.f32 %v1451, %v1459
    %v1462 = vtanh.pop %v1461
    %1464 = vrot.lane.b32.xlu0 %v1462, 64
    %v1465 = vpop.permute.xlu0 %1464
    %v1467 = vmul.f32 %v1450, %v1465
    %v1468 = vsel %vm1120, %v1201, %v1210
    %v1469 = vsel %vm1121, %v1242, %v1251
    %v1471 = vsel %vm1261, %v1467, 0
    %1473 = vmatpush.msra.mxu0 0.0
    %1474 = vmatpush.msra.mxu0 0.0
    %1475 = vmatpush.msra.mxu0 0.0
    %1476 = vmatpush.msra.mxu0 0.0
    %1477 = vmatpush.msra.mxu0 0.0
    %1478 = vmatpush.msra.mxu0 0.0
    %1479 = vmatpush.msra.mxu0 0.0
    %1480 = vmatpush.msra.mxu0 0.0
    %1481 = vmatpush.msra.mxu0 %v1145
    %1482 = vmatpush.msra.mxu0 %v1143
    %1483 = vmatpush.msra.mxu0 %v1141
    %1484 = vmatpush.msra.mxu0 %v1139
    %1485 = vmatpush.msra.mxu0 %v1137
    %1486 = vmatpush.msra.mxu0 %v1135
    %1487 = vmatpush.msra.mxu0 %v1133
    %1488 = vmatpush.msra.mxu0 %v1131
    %1489 = vmatmul.f32.gmra.mxu0 %v1471
    %v1490 = vpop.f32.mrf.mxu0
    %v1491 = vadd.f32 0.0, %v1490
    %1492 = vdwg.mxu0
    %1493 = vmatpush.msra.mxu0 0.0
    %1494 = vmatpush.msra.mxu0 0.0
    %1495 = vmatpush.msra.mxu0 0.0
    %1496 = vmatpush.msra.mxu0 0.0
    %1497 = vmatpush.msra.mxu0 0.0
    %1498 = vmatpush.msra.mxu0 0.0
    %1499 = vmatpush.msra.mxu0 0.0
    %1500 = vmatpush.msra.mxu0 0.0
    %1501 = vmatpush.msra.mxu0 %v1146
    %1502 = vmatpush.msra.mxu0 %v1144
    %1503 = vmatpush.msra.mxu0 %v1142
    %1504 = vmatpush.msra.mxu0 %v1140
    %1505 = vmatpush.msra.mxu0 %v1138
    %1506 = vmatpush.msra.mxu0 %v1136
    %1507 = vmatpush.msra.mxu0 %v1134
    %1508 = vmatpush.msra.mxu0 %v1132
    %1509 = vmatmul.f32.gmra.mxu0 %v1471
    %v1510 = vpop.f32.mrf.mxu0
    %v1511 = vadd.f32 0.0, %v1510
    %1512 = vdwg.mxu0
    %v1513 = vadd.f32 %v1468, %v1491
    %v1514 = vadd.f32 %v1469, %v1511
    %v1515 = vxor.u32 %v1513, 2147483648
    %v1516 = vxor.u32 %v1514, 2147483648
    %v1517 = vmul.f32 %v1515, 1.442695
    %v1518 = vpow.pop %v1517
    %v1519 = vmul.f32 %v1516, 1.442695
    %v1520 = vpow.pop %v1519
    %v1521 = vadd.f32 %v1518, 1.0
    %v1522 = vadd.f32 %v1520, 1.0
    %v1523 = vrcp.pop %v1521
    %v1524 = vmul.f32 %v1521, %v1523
    %v1525 = vsub.f32 1.0, %v1524
    %v1526 = vmul.f32 %v1523, %v1525
    %v1527 = vadd.f32 %v1523, %v1526
    %vm1528 = vweird.f32 %v1521
    %vm1529 = vweird.f32 %v1523
    %vm1530 = vmor %vm1528, %vm1529
    %v1531 = vsel %vm1530, %v1523, %v1527
    %v1532 = vand.u32 2147483647, %v1521
    %vm1533 = vcmp.eq.f32.partialorder %v1532, 8.507059e+37
    %v1534 = vand.u32 %v1521, 2147483648
    %v1535 = vor.u32 1.1754944e-38, %v1534
    %v1536 = vsel %vm1533, %v1535, %v1531
    %v1537 = vmul.f32 1.0, %v1536
    %v1538 = vrcp.pop %v1522
    %v1539 = vmul.f32 %v1522, %v1538
    %v1540 = vsub.f32 1.0, %v1539
    %v1541 = vmul.f32 %v1538, %v1540
    %v1542 = vadd.f32 %v1538, %v1541
    %vm1543 = vweird.f32 %v1522
    %vm1544 = vweird.f32 %v1538
    %vm1545 = vmor %vm1543, %vm1544
    %v1546 = vsel %vm1545, %v1538, %v1542
    %v1547 = vand.u32 2147483647, %v1522
    %vm1548 = vcmp.eq.f32.partialorder %v1547, 8.507059e+37
    %v1549 = vand.u32 %v1522, 2147483648
    %v1550 = vor.u32 1.1754944e-38, %v1549
    %v1551 = vsel %vm1548, %v1550, %v1546
    %v1552 = vmul.f32 1.0, %v1551
    %v1553 = vtanh.pop %v1514
    %v1554 = vsel %vm1122, %v1553, %v1552
    %v1555 = vmul.f32 %v1537, %v1461
    %1557 = vrot.lane.b32.xlu0 %v1554, 64
    %v1558 = vpop.permute.xlu0 %1557
    %v1560 = vmul.f32 %v1537, %v1558
    %1562 = vrot.lane.b32.xlu0 %v1560, 64
    %v1563 = vpop.permute.xlu0 %1562
    %v1565 = vadd.f32 %v1555, %v1563
    %v1566 = vtanh.pop %v1565
    %1568 = vrot.lane.b32.xlu0 %v1566, 64
    %v1569 = vpop.permute.xlu0 %1568
    %v1571 = vmul.f32 %v1554, %v1569
    %v1572 = vsel %vm1120, %v1204, %v1207
    %v1573 = vsel %vm1121, %v1245, %v1248
    %v1575 = vsel %vm1261, %v1571, 0
    %1577 = vmatpush.msra.mxu0 0.0
    %1578 = vmatpush.msra.mxu0 0.0
    %1579 = vmatpush.msra.mxu0 0.0
    %1580 = vmatpush.msra.mxu0 0.0
    %1581 = vmatpush.msra.mxu0 0.0
    %1582 = vmatpush.msra.mxu0 0.0
    %1583 = vmatpush.msra.mxu0 0.0
    %1584 = vmatpush.msra.mxu0 0.0
    %1585 = vmatpush.msra.mxu0 %v1145
    %1586 = vmatpush.msra.mxu0 %v1143
    %1587 = vmatpush.msra.mxu0 %v1141
    %1588 = vmatpush.msra.mxu0 %v1139
    %1589 = vmatpush.msra.mxu0 %v1137
    %1590 = vmatpush.msra.mxu0 %v1135
    %1591 = vmatpush.msra.mxu0 %v1133
    %1592 = vmatpush.msra.mxu0 %v1131
    %1593 = vmatmul.f32.gmra.mxu0 %v1575
    %v1594 = vpop.f32.mrf.mxu0
    %v1595 = vadd.f32 0.0, %v1594
    %1596 = vdwg.mxu0
    %1597 = vmatpush.msra.mxu0 0.0
    %1598 = vmatpush.msra.mxu0 0.0
    %1599 = vmatpush.msra.mxu0 0.0
    %1600 = vmatpush.msra.mxu0 0.0
    %1601 = vmatpush.msra.mxu0 0.0
    %1602 = vmatpush.msra.mxu0 0.0
    %1603 = vmatpush.msra.mxu0 0.0
    %1604 = vmatpush.msra.mxu0 0.0
    %1605 = vmatpush.msra.mxu0 %v1146
    %1606 = vmatpush.msra.mxu0 %v1144
    %1607 = vmatpush.msra.mxu0 %v1142
    %1608 = vmatpush.msra.mxu0 %v1140
    %1609 = vmatpush.msra.mxu0 %v1138
    %1610 = vmatpush.msra.mxu0 %v1136
    %1611 = vmatpush.msra.mxu0 %v1134
    %1612 = vmatpush.msra.mxu0 %v1132
    %1613 = vmatmul.f32.gmra.mxu0 %v1575
    %v1614 = vpop.f32.mrf.mxu0
    %v1615 = vadd.f32 0.0, %v1614
    %1616 = vdwg.mxu0
    %v1617 = vadd.f32 %v1572, %v1595
    %v1618 = vadd.f32 %v1573, %v1615
    %v1619 = vxor.u32 %v1617, 2147483648
    %v1620 = vxor.u32 %v1618, 2147483648
    %v1621 = vmul.f32 %v1619, 1.442695
    %v1622 = vpow.pop %v1621
    %v1623 = vmul.f32 %v1620, 1.442695
    %v1624 = vpow.pop %v1623
    %v1625 = vadd.f32 %v1622, 1.0
    %v1626 = vadd.f32 %v1624, 1.0
    %v1627 = vrcp.pop %v1625
    %v1628 = vmul.f32 %v1625, %v1627
    %v1629 = vsub.f32 1.0, %v1628
    %v1630 = vmul.f32 %v1627, %v1629
    %v1631 = vadd.f32 %v1627, %v1630
    %vm1632 = vweird.f32 %v1625
    %vm1633 = vweird.f32 %v1627
    %vm1634 = vmor %vm1632, %vm1633
    %v1635 = vsel %vm1634, %v1627, %v1631
    %v1636 = vand.u32 2147483647, %v1625
    %vm1637 = vcmp.eq.f32.partialorder %v1636, 8.507059e+37
    %v1638 = vand.u32 %v1625, 2147483648
    %v1639 = vor.u32 1.1754944e-38, %v1638
    %v1640 = vsel %vm1637, %v1639, %v1635
    %v1641 = vmul.f32 1.0, %v1640
    %v1642 = vrcp.pop %v1626
    %v1643 = vmul.f32 %v1626, %v1642
    %v1644 = vsub.f32 1.0, %v1643
    %v1645 = vmul.f32 %v1642, %v1644
    %v1646 = vadd.f32 %v1642, %v1645
    %vm1647 = vweird.f32 %v1626
    %vm1648 = vweird.f32 %v1642
    %vm1649 = vmor %vm1647, %vm1648
    %v1650 = vsel %vm1649, %v1642, %v1646
    %v1651 = vand.u32 2147483647, %v1626
    %vm1652 = vcmp.eq.f32.partialorder %v1651, 8.507059e+37
    %v1653 = vand.u32 %v1626, 2147483648
    %v1654 = vor.u32 1.1754944e-38, %v1653
    %v1655 = vsel %vm1652, %v1654, %v1650
    %v1656 = vmul.f32 1.0, %v1655
    %v1657 = vtanh.pop %v1618
    %v1658 = vsel %vm1122, %v1657, %v1656
    %v1659 = vmul.f32 %v1641, %v1565
    %1661 = vrot.lane.b32.xlu0 %v1658, 64
    %v1662 = vpop.permute.xlu0 %1661
    %v1664 = vmul.f32 %v1641, %v1662
    %1666 = vrot.lane.b32.xlu0 %v1664, 64
    %v1667 = vpop.permute.xlu0 %1666
    %v1669 = vadd.f32 %v1659, %v1667
    %v1670 = vtanh.pop %v1669
    %1672 = vrot.lane.b32.xlu0 %v1670, 64
    %v1673 = vpop.permute.xlu0 %1672
    %v1675 = vmul.f32 %v1658, %v1673
    %v1676 = vsel %vm1120, %v1207, %v1204
    %v1677 = vsel %vm1121, %v1248, %v1245
    %v1679 = vsel %vm1261, %v1675, 0
    %1681 = vmatpush.msra.mxu0 0.0
    %1682 = vmatpush.msra.mxu0 0.0
    %1683 = vmatpush.msra.mxu0 0.0
    %1684 = vmatpush.msra.mxu0 0.0
    %1685 = vmatpush.msra.mxu0 0.0
    %1686 = vmatpush.msra.mxu0 0.0
    %1687 = vmatpush.msra.mxu0 0.0
    %1688 = vmatpush.msra.mxu0 0.0
    %1689 = vmatpush.msra.mxu0 %v1145
    %1690 = vmatpush.msra.mxu0 %v1143
    %1691 = vmatpush.msra.mxu0 %v1141
    %1692 = vmatpush.msra.mxu0 %v1139
    %1693 = vmatpush.msra.mxu0 %v1137
    %1694 = vmatpush.msra.mxu0 %v1135
    %1695 = vmatpush.msra.mxu0 %v1133
    %1696 = vmatpush.msra.mxu0 %v1131
    %1697 = vmatmul.f32.gmra.mxu0 %v1679
    %v1698 = vpop.f32.mrf.mxu0
    %v1699 = vadd.f32 0.0, %v1698
    %1700 = vdwg.mxu0
    %1701 = vmatpush.msra.mxu0 0.0
    %1702 = vmatpush.msra.mxu0 0.0
    %1703 = vmatpush.msra.mxu0 0.0
    %1704 = vmatpush.msra.mxu0 0.0
    %1705 = vmatpush.msra.mxu0 0.0
    %1706 = vmatpush.msra.mxu0 0.0
    %1707 = vmatpush.msra.mxu0 0.0
    %1708 = vmatpush.msra.mxu0 0.0
    %1709 = vmatpush.msra.mxu0 %v1146
    %1710 = vmatpush.msra.mxu0 %v1144
    %1711 = vmatpush.msra.mxu0 %v1142
    %1712 = vmatpush.msra.mxu0 %v1140
    %1713 = vmatpush.msra.mxu0 %v1138
    %1714 = vmatpush.msra.mxu0 %v1136
    %1715 = vmatpush.msra.mxu0 %v1134
    %1716 = vmatpush.msra.mxu0 %v1132
    %1717 = vmatmul.f32.gmra.mxu0 %v1679
    %v1718 = vpop.f32.mrf.mxu0
    %v1719 = vadd.f32 0.0, %v1718
    %1720 = vdwg.mxu0
    %v1721 = vadd.f32 %v1676, %v1699
    %v1722 = vadd.f32 %v1677, %v1719
    %v1723 = vxor.u32 %v1721, 2147483648
    %v1724 = vxor.u32 %v1722, 2147483648
    %v1725 = vmul.f32 %v1723, 1.442695
    %v1726 = vpow.pop %v1725
    %v1727 = vmul.f32 %v1724, 1.442695
    %v1728 = vpow.pop %v1727
    %v1729 = vadd.f32 %v1726, 1.0
    %v1730 = vadd.f32 %v1728, 1.0
    %v1731 = vrcp.pop %v1729
    %v1732 = vmul.f32 %v1729, %v1731
    %v1733 = vsub.f32 1.0, %v1732
    %v1734 = vmul.f32 %v1731, %v1733
    %v1735 = vadd.f32 %v1731, %v1734
    %vm1736 = vweird.f32 %v1729
    %vm1737 = vweird.f32 %v1731
    %vm1738 = vmor %vm1736, %vm1737
    %v1739 = vsel %vm1738, %v1731, %v1735
    %v1740 = vand.u32 2147483647, %v1729
    %vm1741 = vcmp.eq.f32.partialorder %v1740, 8.507059e+37
    %v1742 = vand.u32 %v1729, 2147483648
    %v1743 = vor.u32 1.1754944e-38, %v1742
    %v1744 = vsel %vm1741, %v1743, %v1739
    %v1745 = vmul.f32 1.0, %v1744
    %v1746 = vrcp.pop %v1730
    %v1747 = vmul.f32 %v1730, %v1746
    %v1748 = vsub.f32 1.0, %v1747
    %v1749 = vmul.f32 %v1746, %v1748
    %v1750 = vadd.f32 %v1746, %v1749
    %vm1751 = vweird.f32 %v1730
    %vm1752 = vweird.f32 %v1746
    %vm1753 = vmor %vm1751, %vm1752
    %v1754 = vsel %vm1753, %v1746, %v1750
    %v1755 = vand.u32 2147483647, %v1730
    %vm1756 = vcmp.eq.f32.partialorder %v1755, 8.507059e+37
    %v1757 = vand.u32 %v1730, 2147483648
    %v1758 = vor.u32 1.1754944e-38, %v1757
    %v1759 = vsel %vm1756, %v1758, %v1754
    %v1760 = vmul.f32 1.0, %v1759
    %v1761 = vtanh.pop %v1722
    %v1762 = vsel %vm1122, %v1761, %v1760
    %v1763 = vmul.f32 %v1745, %v1669
    %1765 = vrot.lane.b32.xlu0 %v1762, 64
    %v1766 = vpop.permute.xlu0 %1765
    %v1768 = vmul.f32 %v1745, %v1766
    %1770 = vrot.lane.b32.xlu0 %v1768, 64
    %v1771 = vpop.permute.xlu0 %1770
    %v1773 = vadd.f32 %v1763, %v1771
    %v1774 = vtanh.pop %v1773
    %1776 = vrot.lane.b32.xlu0 %v1774, 64
    %v1777 = vpop.permute.xlu0 %1776
    %v1779 = vmul.f32 %v1762, %v1777
    %v1780 = vsel %vm1120, %v1210, %v1201
    %v1781 = vsel %vm1121, %v1251, %v1242
    %v1783 = vsel %vm1261, %v1779, 0
    %1785 = vmatpush.msra.mxu0 0.0
    %1786 = vmatpush.msra.mxu0 0.0
    %1787 = vmatpush.msra.mxu0 0.0
    %1788 = vmatpush.msra.mxu0 0.0
    %1789 = vmatpush.msra.mxu0 0.0
    %1790 = vmatpush.msra.mxu0 0.0
    %1791 = vmatpush.msra.mxu0 0.0
    %1792 = vmatpush.msra.mxu0 0.0
    %1793 = vmatpush.msra.mxu0 %v1145
    %1794 = vmatpush.msra.mxu0 %v1143
    %1795 = vmatpush.msra.mxu0 %v1141
    %1796 = vmatpush.msra.mxu0 %v1139
    %1797 = vmatpush.msra.mxu0 %v1137
    %1798 = vmatpush.msra.mxu0 %v1135
    %1799 = vmatpush.msra.mxu0 %v1133
    %1800 = vmatpush.msra.mxu0 %v1131
    %1801 = vmatmul.f32.gmra.mxu0 %v1783
    %v1802 = vpop.f32.mrf.mxu0
    %v1803 = vadd.f32 0.0, %v1802
    %1804 = vdwg.mxu0
    %1805 = vmatpush.msra.mxu0 0.0
    %1806 = vmatpush.msra.mxu0 0.0
    %1807 = vmatpush.msra.mxu0 0.0
    %1808 = vmatpush.msra.mxu0 0.0
    %1809 = vmatpush.msra.mxu0 0.0
    %1810 = vmatpush.msra.mxu0 0.0
    %1811 = vmatpush.msra.mxu0 0.0
    %1812 = vmatpush.msra.mxu0 0.0
    %1813 = vmatpush.msra.mxu0 %v1146
    %1814 = vmatpush.msra.mxu0 %v1144
    %1815 = vmatpush.msra.mxu0 %v1142
    %1816 = vmatpush.msra.mxu0 %v1140
    %1817 = vmatpush.msra.mxu0 %v1138
    %1818 = vmatpush.msra.mxu0 %v1136
    %1819 = vmatpush.msra.mxu0 %v1134
    %1820 = vmatpush.msra.mxu0 %v1132
    %1821 = vmatmul.f32.gmra.mxu0 %v1783
    %v1822 = vpop.f32.mrf.mxu0
    %v1823 = vadd.f32 0.0, %v1822
    %1824 = vdwg.mxu0
    %v1825 = vadd.f32 %v1780, %v1803
    %v1826 = vadd.f32 %v1781, %v1823
    %v1827 = vxor.u32 %v1825, 2147483648
    %v1828 = vxor.u32 %v1826, 2147483648
    %v1829 = vmul.f32 %v1827, 1.442695
    %v1830 = vpow.pop %v1829
    %v1831 = vmul.f32 %v1828, 1.442695
    %v1832 = vpow.pop %v1831
    %v1833 = vadd.f32 %v1830, 1.0
    %v1834 = vadd.f32 %v1832, 1.0
    %v1835 = vrcp.pop %v1833
    %v1836 = vmul.f32 %v1833, %v1835
    %v1837 = vsub.f32 1.0, %v1836
    %v1838 = vmul.f32 %v1835, %v1837
    %v1839 = vadd.f32 %v1835, %v1838
    %vm1840 = vweird.f32 %v1833
    %vm1841 = vweird.f32 %v1835
    %vm1842 = vmor %vm1840, %vm1841
    %v1843 = vsel %vm1842, %v1835, %v1839
    %v1844 = vand.u32 2147483647, %v1833
    %vm1845 = vcmp.eq.f32.partialorder %v1844, 8.507059e+37
    %v1846 = vand.u32 %v1833, 2147483648
    %v1847 = vor.u32 1.1754944e-38, %v1846
    %v1848 = vsel %vm1845, %v1847, %v1843
    %v1849 = vmul.f32 1.0, %v1848
    %v1850 = vrcp.pop %v1834
    %v1851 = vmul.f32 %v1834, %v1850
    %v1852 = vsub.f32 1.0, %v1851
    %v1853 = vmul.f32 %v1850, %v1852
    %v1854 = vadd.f32 %v1850, %v1853
    %vm1855 = vweird.f32 %v1834
    %vm1856 = vweird.f32 %v1850
    %vm1857 = vmor %vm1855, %vm1856
    %v1858 = vsel %vm1857, %v1850, %v1854
    %v1859 = vand.u32 2147483647, %v1834
    %vm1860 = vcmp.eq.f32.partialorder %v1859, 8.507059e+37
    %v1861 = vand.u32 %v1834, 2147483648
    %v1862 = vor.u32 1.1754944e-38, %v1861
    %v1863 = vsel %vm1860, %v1862, %v1858
    %v1864 = vmul.f32 1.0, %v1863
    %v1865 = vtanh.pop %v1826
    %v1866 = vsel %vm1122, %v1865, %v1864
    %v1867 = vmul.f32 %v1849, %v1773
    %1869 = vrot.lane.b32.xlu0 %v1866, 64
    %v1870 = vpop.permute.xlu0 %1869
    %v1872 = vmul.f32 %v1849, %v1870
    %1874 = vrot.lane.b32.xlu0 %v1872, 64
    %v1875 = vpop.permute.xlu0 %1874
    %v1877 = vadd.f32 %v1867, %v1875
    %v1878 = vtanh.pop %v1877
    %1880 = vrot.lane.b32.xlu0 %v1878, 64
    %v1881 = vpop.permute.xlu0 %1880
    %v1883 = vmul.f32 %v1866, %v1881
    %v1884 = vsel %vm1120, %v1213, %v1198
    %v1885 = vsel %vm1121, %v1254, %v1239
    %v1887 = vsel %vm1261, %v1883, 0
    %1889 = vmatpush.msra.mxu0 0.0
    %1890 = vmatpush.msra.mxu0 0.0
    %1891 = vmatpush.msra.mxu0 0.0
    %1892 = vmatpush.msra.mxu0 0.0
    %1893 = vmatpush.msra.mxu0 0.0
    %1894 = vmatpush.msra.mxu0 0.0
    %1895 = vmatpush.msra.mxu0 0.0
    %1896 = vmatpush.msra.mxu0 0.0
    %1897 = vmatpush.msra.mxu0 %v1145
    %1898 = vmatpush.msra.mxu0 %v1143
    %1899 = vmatpush.msra.mxu0 %v1141
    %1900 = vmatpush.msra.mxu0 %v1139
    %1901 = vmatpush.msra.mxu0 %v1137
    %1902 = vmatpush.msra.mxu0 %v1135
    %1903 = vmatpush.msra.mxu0 %v1133
    %1904 = vmatpush.msra.mxu0 %v1131
    %1905 = vmatmul.f32.gmra.mxu0 %v1887
    %v1906 = vpop.f32.mrf.mxu0
    %v1907 = vadd.f32 0.0, %v1906
    %1908 = vdwg.mxu0
    %1909 = vmatpush.msra.mxu0 0.0
    %1910 = vmatpush.msra.mxu0 0.0
    %1911 = vmatpush.msra.mxu0 0.0
    %1912 = vmatpush.msra.mxu0 0.0
    %1913 = vmatpush.msra.mxu0 0.0
    %1914 = vmatpush.msra.mxu0 0.0
    %1915 = vmatpush.msra.mxu0 0.0
    %1916 = vmatpush.msra.mxu0 0.0
    %1917 = vmatpush.msra.mxu0 %v1146
    %1918 = vmatpush.msra.mxu0 %v1144
    %1919 = vmatpush.msra.mxu0 %v1142
    %1920 = vmatpush.msra.mxu0 %v1140
    %1921 = vmatpush.msra.mxu0 %v1138
    %1922 = vmatpush.msra.mxu0 %v1136
    %1923 = vmatpush.msra.mxu0 %v1134
    %1924 = vmatpush.msra.mxu0 %v1132
    %1925 = vmatmul.f32.gmra.mxu0 %v1887
    %v1926 = vpop.f32.mrf.mxu0
    %v1927 = vadd.f32 0.0, %v1926
    %1928 = vdwg.mxu0
    %v1929 = vadd.f32 %v1884, %v1907
    %v1930 = vadd.f32 %v1885, %v1927
    %v1931 = vxor.u32 %v1929, 2147483648
    %v1932 = vxor.u32 %v1930, 2147483648
    %v1933 = vmul.f32 %v1931, 1.442695
    %v1934 = vpow.pop %v1933
    %v1935 = vmul.f32 %v1932, 1.442695
    %v1936 = vpow.pop %v1935
    %v1937 = vadd.f32 %v1934, 1.0
    %v1938 = vadd.f32 %v1936, 1.0
    %v1939 = vrcp.pop %v1937
    %v1940 = vmul.f32 %v1937, %v1939
    %v1941 = vsub.f32 1.0, %v1940
    %v1942 = vmul.f32 %v1939, %v1941
    %v1943 = vadd.f32 %v1939, %v1942
    %vm1944 = vweird.f32 %v1937
    %vm1945 = vweird.f32 %v1939
    %vm1946 = vmor %vm1944, %vm1945
    %v1947 = vsel %vm1946, %v1939, %v1943
    %v1948 = vand.u32 2147483647, %v1937
    %vm1949 = vcmp.eq.f32.partialorder %v1948, 8.507059e+37
    %v1950 = vand.u32 %v1937, 2147483648
    %v1951 = vor.u32 1.1754944e-38, %v1950
    %v1952 = vsel %vm1949, %v1951, %v1947
    %v1953 = vmul.f32 1.0, %v1952
    %v1954 = vrcp.pop %v1938
    %v1955 = vmul.f32 %v1938, %v1954
    %v1956 = vsub.f32 1.0, %v1955
    %v1957 = vmul.f32 %v1954, %v1956
    %v1958 = vadd.f32 %v1954, %v1957
    %vm1959 = vweird.f32 %v1938
    %vm1960 = vweird.f32 %v1954
    %vm1961 = vmor %vm1959, %vm1960
    %v1962 = vsel %vm1961, %v1954, %v1958
    %v1963 = vand.u32 2147483647, %v1938
    %vm1964 = vcmp.eq.f32.partialorder %v1963, 8.507059e+37
    %v1965 = vand.u32 %v1938, 2147483648
    %v1966 = vor.u32 1.1754944e-38, %v1965
    %v1967 = vsel %vm1964, %v1966, %v1962
    %v1968 = vmul.f32 1.0, %v1967
    %v1969 = vtanh.pop %v1930
    %v1970 = vsel %vm1122, %v1969, %v1968
    %v1971 = vmul.f32 %v1953, %v1877
    %1973 = vrot.lane.b32.xlu0 %v1970, 64
    %v1974 = vpop.permute.xlu0 %1973
    %v1976 = vmul.f32 %v1953, %v1974
    %1978 = vrot.lane.b32.xlu0 %v1976, 64
    %v1979 = vpop.permute.xlu0 %1978
    %v1981 = vadd.f32 %v1971, %v1979
    %v1982 = vtanh.pop %v1981
    %1984 = vrot.lane.b32.xlu0 %v1982, 64
    %v1985 = vpop.permute.xlu0 %1984
    %v1987 = vmul.f32 %v1970, %v1985
    %v1988 = vsel %vm1120, %v1216, %v1195
    %v1989 = vsel %vm1121, %v1257, %v1236
    %v1991 = vsel %vm1261, %v1987, 0
    %1993 = vmatpush.msra.mxu0 0.0
    %1994 = vmatpush.msra.mxu0 0.0
    %1995 = vmatpush.msra.mxu0 0.0
    %1996 = vmatpush.msra.mxu0 0.0
    %1997 = vmatpush.msra.mxu0 0.0
    %1998 = vmatpush.msra.mxu0 0.0
    %1999 = vmatpush.msra.mxu0 0.0
    %2000 = vmatpush.msra.mxu0 0.0
    %2001 = vmatpush.msra.mxu0 %v1145
    %2002 = vmatpush.msra.mxu0 %v1143
    %2003 = vmatpush.msra.mxu0 %v1141
    %2004 = vmatpush.msra.mxu0 %v1139
    %2005 = vmatpush.msra.mxu0 %v1137
    %2006 = vmatpush.msra.mxu0 %v1135
    %2007 = vmatpush.msra.mxu0 %v1133
    %2008 = vmatpush.msra.mxu0 %v1131
    %2009 = vmatmul.f32.gmra.mxu0 %v1991
    %v2010 = vpop.f32.mrf.mxu0
    %v2011 = vadd.f32 0.0, %v2010
    %2012 = vdwg.mxu0
    %2013 = vmatpush.msra.mxu0 0.0
    %2014 = vmatpush.msra.mxu0 0.0
    %2015 = vmatpush.msra.mxu0 0.0
    %2016 = vmatpush.msra.mxu0 0.0
    %2017 = vmatpush.msra.mxu0 0.0
    %2018 = vmatpush.msra.mxu0 0.0
    %2019 = vmatpush.msra.mxu0 0.0
    %2020 = vmatpush.msra.mxu0 0.0
    %2021 = vmatpush.msra.mxu0 %v1146
    %2022 = vmatpush.msra.mxu0 %v1144
    %2023 = vmatpush.msra.mxu0 %v1142
    %2024 = vmatpush.msra.mxu0 %v1140
    %2025 = vmatpush.msra.mxu0 %v1138
    %2026 = vmatpush.msra.mxu0 %v1136
    %2027 = vmatpush.msra.mxu0 %v1134
    %2028 = vmatpush.msra.mxu0 %v1132
    %2029 = vmatmul.f32.gmra.mxu0 %v1991
    %v2030 = vpop.f32.mrf.mxu0
    %v2031 = vadd.f32 0.0, %v2030
    %2032 = vdwg.mxu0
    %v2033 = vadd.f32 %v1988, %v2011
    %v2034 = vadd.f32 %v1989, %v2031
    %v2035 = vxor.u32 %v2033, 2147483648
    %v2036 = vxor.u32 %v2034, 2147483648
    %v2037 = vmul.f32 %v2035, 1.442695
    %v2038 = vpow.pop %v2037
    %v2039 = vmul.f32 %v2036, 1.442695
    %v2040 = vpow.pop %v2039
    %v2041 = vadd.f32 %v2038, 1.0
    %v2042 = vadd.f32 %v2040, 1.0
    %v2043 = vrcp.pop %v2041
    %v2044 = vmul.f32 %v2041, %v2043
    %v2045 = vsub.f32 1.0, %v2044
    %v2046 = vmul.f32 %v2043, %v2045
    %v2047 = vadd.f32 %v2043, %v2046
    %vm2048 = vweird.f32 %v2041
    %vm2049 = vweird.f32 %v2043
    %vm2050 = vmor %vm2048, %vm2049
    %v2051 = vsel %vm2050, %v2043, %v2047
    %v2052 = vand.u32 2147483647, %v2041
    %vm2053 = vcmp.eq.f32.partialorder %v2052, 8.507059e+37
    %v2054 = vand.u32 %v2041, 2147483648
    %v2055 = vor.u32 1.1754944e-38, %v2054
    %v2056 = vsel %vm2053, %v2055, %v2051
    %v2057 = vmul.f32 1.0, %v2056
    %v2058 = vrcp.pop %v2042
    %v2059 = vmul.f32 %v2042, %v2058
    %v2060 = vsub.f32 1.0, %v2059
    %v2061 = vmul.f32 %v2058, %v2060
    %v2062 = vadd.f32 %v2058, %v2061
    %vm2063 = vweird.f32 %v2042
    %vm2064 = vweird.f32 %v2058
    %vm2065 = vmor %vm2063, %vm2064
    %v2066 = vsel %vm2065, %v2058, %v2062
    %v2067 = vand.u32 2147483647, %v2042
    %vm2068 = vcmp.eq.f32.partialorder %v2067, 8.507059e+37
    %v2069 = vand.u32 %v2042, 2147483648
    %v2070 = vor.u32 1.1754944e-38, %v2069
    %v2071 = vsel %vm2068, %v2070, %v2066
    %v2072 = vmul.f32 1.0, %v2071
    %v2073 = vtanh.pop %v2034
    %v2074 = vsel %vm1122, %v2073, %v2072
    %v2075 = vmul.f32 %v2057, %v1981
    %2077 = vrot.lane.b32.xlu0 %v2074, 64
    %v2078 = vpop.permute.xlu0 %2077
    %v2080 = vmul.f32 %v2057, %v2078
    %2082 = vrot.lane.b32.xlu0 %v2080, 64
    %v2083 = vpop.permute.xlu0 %2082
    %v2085 = vadd.f32 %v2075, %v2083
    %v2086 = vtanh.pop %v2085
    %2088 = vrot.lane.b32.xlu0 %v2086, 64
    %v2089 = vpop.permute.xlu0 %2088
    %v2091 = vmul.f32 %v2074, %v2089
    %vm2100 = vcmask 1041409
    %v2101 = vsel %vm2100, %v765, %v758
    %vm2102 = vcmask 1042434
    %v2103 = vsel %vm2102, %v772, %v2101
    %vm2104 = vcmask 1043459
    %v2105 = vsel %vm2104, %v779, %v2103
    %vm2106 = vcmask 1044484
    %v2107 = vsel %vm2106, %v786, %v2105
    %vm2108 = vcmask 1045509
    %v2109 = vsel %vm2108, %v793, %v2107
    %vm2110 = vcmask 1046534
    %v2111 = vsel %vm2110, %v800, %v2109
    %vm2112 = vcmask 1047559
    %v2113 = vsel %vm2112, %v807, %v2111
    %v2123 = vsel %vm2100, %v934, %v927
    %v2124 = vsel %vm2102, %v941, %v2123
    %v2125 = vsel %vm2104, %v948, %v2124
    %v2126 = vsel %vm2106, %v955, %v2125
    %v2127 = vsel %vm2108, %v962, %v2126
    %v2128 = vsel %vm2110, %v969, %v2127
    %v2129 = vsel %vm2112, %v976, %v2128
    %2130 = vrot.lane.b32.xlu0 %v2129, 32
    %v2131 = vpop.permute.xlu0 %2130
    %2134 = vrot.lane.b32.xlu0 %v2091, 64
    %v2135 = vpop.permute.xlu0 %2134
    %v2137 = vsel %vm62, %v2113, %v2131
    %v2138 = vsel %vm1261, %v2137, %v2135
    %v2139 = vld [vmem:[%s6] sm:$0xff]
    %v2140 = vld [vmem:[%s6 + $0x8] sm:$0xff]
    %v2141 = vld [vmem:[%s6 + $0x10] sm:$0xff]
    %v2142 = vld [vmem:[%s6 + $0x18] sm:$0xff]
    %v2143 = vsel %vm62, %v634, 0.0
    %v2144 = vrot.slane %v2143, 4
    %v2145 = vadd.f32 %v2143, %v2144
    %v2146 = vrot.slane %v2145, 2
    %v2147 = vadd.f32 %v2145, %v2146
    %v2148 = vrot.slane %v2147, 1
    %v2149 = vadd.f32 %v2147, %v2148
    %v2150 = vsel %vm62, %v637, 0.0
    %v2151 = vrot.slane %v2150, 4
    %v2152 = vadd.f32 %v2150, %v2151
    %v2153 = vrot.slane %v2152, 2
    %v2154 = vadd.f32 %v2152, %v2153
    %v2155 = vrot.slane %v2154, 1
    %v2156 = vadd.f32 %v2154, %v2155
    %v2157 = vrcp.pop 8.0
    %v2158 = vmul.f32 8.0, %v2157
    %v2159 = vsub.f32 1.0, %v2158
    %v2160 = vmul.f32 %v2157, %v2159
    %v2161 = vadd.f32 %v2157, %v2160
    %vm2162 = vweird.f32 %v2157
    %v2163 = vsel %vm2162, %v2157, %v2161
    %v2164 = vmul.f32 %v2149, %v2163
    %v2165 = vmul.f32 %v2156, %v2163
    %v2167 = vsel %vm62, %v634, 0
    %v2170 = vsel %vm62, %v637, 0
    %2172 = vmatpush.msra.mxu0 0.0
    %2173 = vmatpush.msra.mxu0 0.0
    %2174 = vmatpush.msra.mxu0 0.0
    %2175 = vmatpush.msra.mxu0 0.0
    %2176 = vmatpush.msra.mxu0 0.0
    %2177 = vmatpush.msra.mxu0 0.0
    %2178 = vmatpush.msra.mxu0 0.0
    %2179 = vmatpush.msra.mxu0 0.0
    %2180 = vmatpush.msra.mxu0 0.0
    %2181 = vmatpush.msra.mxu0 0.0
    %2182 = vmatpush.msra.mxu0 0.0
    %2183 = vmatpush.msra.mxu0 0.0
    %2184 = vmatpush.msra.mxu0 %v2142
    %2185 = vmatpush.msra.mxu0 %v2141
    %2186 = vmatpush.msra.mxu0 %v2140
    %2187 = vmatpush.msra.mxu0 %v2139
    %2188 = vmatmul.f32.gmra.mxu0 %v2167
    %v2189 = vpop.f32.mrf.mxu0
    %v2190 = vadd.f32 0.0, %v2189
    %2191 = vmatmul.f32.gmra.mxu0 %v2170
    %v2192 = vpop.f32.mrf.mxu0
    %v2193 = vadd.f32 0.0, %v2192
    %2194 = vdwg.mxu0
    %v2195 = vmul.f32 %v2190, %v2164
    %v2196 = vmul.f32 %v2193, %v2165
    %v2197 = vsel %vm62, %v2195, 0.0
    %2198 = vadd.xlane.f32.xlu0 %v2197
    %v2199 = vpop.xlane.xlu0 %2198
    %v2200 = vsel %vm62, %v2196, 0.0
    %2201 = vadd.xlane.f32.xlu0 %v2200
    %v2202 = vpop.xlane.xlu0 %2201
    %v2203 = vrot.slane %v2199, 4
    %v2204 = vmax.f32 %v2199, %v2203
    %v2205 = vrot.slane %v2204, 2
    %v2206 = vmax.f32 %v2204, %v2205
    %v2207 = vrot.slane %v2206, 1
    %v2208 = vmax.f32 %v2206, %v2207
    %v2209 = vrot.slane %v2202, 4
    %v2210 = vmax.f32 %v2202, %v2209
    %v2211 = vrot.slane %v2210, 2
    %v2212 = vmax.f32 %v2210, %v2211
    %v2213 = vrot.slane %v2212, 1
    %v2214 = vmax.f32 %v2212, %v2213
    %v2215 = vsub.f32 %v2199, %v2208
    %v2216 = vsub.f32 %v2202, %v2214
    %v2217 = vmul.f32 %v2215, 1.442695
    %v2218 = vpow.pop %v2217
    %v2219 = vmul.f32 %v2216, 1.442695
    %v2220 = vpow.pop %v2219
    %v2221 = vrot.slane %v2218, 4
    %v2222 = vadd.f32 %v2218, %v2221
    %v2223 = vrot.slane %v2222, 2
    %v2224 = vadd.f32 %v2222, %v2223
    %v2225 = vrot.slane %v2224, 1
    %v2226 = vadd.f32 %v2224, %v2225
    %v2227 = vrot.slane %v2220, 4
    %v2228 = vadd.f32 %v2220, %v2227
    %v2229 = vrot.slane %v2228, 2
    %v2230 = vadd.f32 %v2228, %v2229
    %v2231 = vrot.slane %v2230, 1
    %v2232 = vadd.f32 %v2230, %v2231
    %v2233 = vrcp.pop %v2226
    %v2234 = vrcp.pop %v2232
    %v2235 = vmul.f32 %v2218, %v2233
    %v2236 = vmul.f32 %v2220, %v2234
    %v2237 = vmul.f32 %v2235, %v634
    %v2238 = vmul.f32 %v2236, %v637
    %v2239 = vsel %vm62, %v2237, 0.0
    %v2240 = vrot.slane %v2239, 4
    %v2241 = vadd.f32 %v2239, %v2240
    %v2242 = vrot.slane %v2241, 2
    %v2243 = vadd.f32 %v2241, %v2242
    %v2244 = vrot.slane %v2243, 1
    %v2245 = vadd.f32 %v2243, %v2244
    %v2246 = vsel %vm62, %v2238, 0.0
    %v2247 = vrot.slane %v2246, 4
    %v2248 = vadd.f32 %v2246, %v2247
    %v2249 = vrot.slane %v2248, 2
    %v2250 = vadd.f32 %v2248, %v2249
    %v2251 = vrot.slane %v2250, 1
    %v2252 = vadd.f32 %v2250, %v2251
    %v2255 = vsel %vm2100, %v2252, %v2245
    %2257 = vst.msk [vmem:[#allocation2] sm:$0x3] %vm81, %v2255
    %v2258 = vld [vmem:[%s7] sm:$0xff]
    %v2259 = vld [vmem:[%s7 + $0x8] sm:$0xff]
    %v2260 = vld [vmem:[%s7 + $0x10] sm:$0xff]
    %v2261 = vld [vmem:[%s7 + $0x18] sm:$0xff]
    %v2262 = vld [vmem:[%s7 + $0x20] sm:$0xff]
    %v2263 = vld [vmem:[%s7 + $0x28] sm:$0xff]
    %v2264 = vld [vmem:[%s7 + $0x30] sm:$0xff]
    %v2265 = vld [vmem:[%s7 + $0x38] sm:$0xff]
    %v2266 = vld [vmem:[%s7 + $0x40] sm:$0xff]
    %v2267 = vld [vmem:[%s7 + $0x48] sm:$0xff]
    %v2268 = vld [vmem:[%s7 + $0x50] sm:$0xff]
    %v2269 = vld [vmem:[%s7 + $0x58] sm:$0xff]
    %v2270 = vld [vmem:[%s7 + $0x60] sm:$0xff]
    %v2271 = vld [vmem:[%s7 + $0x68] sm:$0xff]
    %v2272 = vld [vmem:[%s7 + $0x70] sm:$0xff]
    %v2273 = vld [vmem:[%s7 + $0x78] sm:$0xff]
    %v2275 = vrot.slane %v2138, 4
    %v2277 = vsel %vm1050, %v2138, 0.0
    %v2278 = vrot.slane %v2277, 4
    %v2279 = vadd.f32 %v2277, %v2278
    %v2280 = vrot.slane %v2279, 2
    %v2281 = vadd.f32 %v2279, %v2280
    %v2282 = vrot.slane %v2281, 1
    %v2283 = vadd.f32 %v2281, %v2282
    %v2284 = vsel %vm1050, %v2275, 0.0
    %v2285 = vrot.slane %v2284, 4
    %v2286 = vadd.f32 %v2284, %v2285
    %v2287 = vrot.slane %v2286, 2
    %v2288 = vadd.f32 %v2286, %v2287
    %v2289 = vrot.slane %v2288, 1
    %v2290 = vadd.f32 %v2288, %v2289
    %v2291 = vrcp.pop 4.0
    %v2292 = vmul.f32 4.0, %v2291
    %v2293 = vsub.f32 1.0, %v2292
    %v2294 = vmul.f32 %v2291, %v2293
    %v2295 = vadd.f32 %v2291, %v2294
    %vm2296 = vweird.f32 %v2291
    %v2297 = vsel %vm2296, %v2291, %v2295
    %v2298 = vmul.f32 %v2283, %v2297
    %v2299 = vmul.f32 %v2290, %v2297
    %2300 = vmatpush.msra.mxu0 %v2273
    %2301 = vmatpush.msra.mxu0 %v2272
    %2302 = vmatpush.msra.mxu0 %v2271
    %2303 = vmatpush.msra.mxu0 %v2270
    %2304 = vmatpush.msra.mxu0 %v2269
    %2305 = vmatpush.msra.mxu0 %v2268
    %2306 = vmatpush.msra.mxu0 %v2267
    %2307 = vmatpush.msra.mxu0 %v2266
    %2308 = vmatpush.msra.mxu0 %v2265
    %2309 = vmatpush.msra.mxu0 %v2264
    %2310 = vmatpush.msra.mxu0 %v2263
    %2311 = vmatpush.msra.mxu0 %v2262
    %2312 = vmatpush.msra.mxu0 %v2261
    %2313 = vmatpush.msra.mxu0 %v2260
    %2314 = vmatpush.msra.mxu0 %v2259
    %2315 = vmatpush.msra.mxu0 %v2258
    %2316 = vmatmul.f32.gmra.mxu0 %v2138
    %v2317 = vpop.f32.mrf.mxu0
    %v2318 = vadd.f32 0.0, %v2317
    %2319 = vdwg.mxu0
    %v2321 = vrot.slane %v2318, 4
    %v2323 = vmul.f32 %v2318, %v2298
    %v2324 = vmul.f32 %v2321, %v2299
    %v2325 = vsel %vm1050, %v2323, 0.0
    %2326 = vadd.xlane.f32.xlu0 %v2325
    %v2327 = vpop.xlane.xlu0 %2326
    %v2328 = vsel %vm1050, %v2324, 0.0
    %2329 = vadd.xlane.f32.xlu0 %v2328
    %v2330 = vpop.xlane.xlu0 %2329
    %v2331 = vsel %vm1050, %v2327, -inf
    %v2332 = vrot.slane %v2331, 4
    %v2333 = vmax.f32 %v2331, %v2332
    %v2334 = vrot.slane %v2333, 2
    %v2335 = vmax.f32 %v2333, %v2334
    %v2336 = vrot.slane %v2335, 1
    %v2337 = vmax.f32 %v2335, %v2336
    %v2338 = vsel %vm1050, %v2330, -inf
    %v2339 = vrot.slane %v2338, 4
    %v2340 = vmax.f32 %v2338, %v2339
    %v2341 = vrot.slane %v2340, 2
    %v2342 = vmax.f32 %v2340, %v2341
    %v2343 = vrot.slane %v2342, 1
    %v2344 = vmax.f32 %v2342, %v2343
    %v2345 = vsub.f32 %v2327, %v2337
    %v2346 = vsub.f32 %v2330, %v2344
    %v2347 = vmul.f32 %v2345, 1.442695
    %v2348 = vpow.pop %v2347
    %v2349 = vmul.f32 %v2346, 1.442695
    %v2350 = vpow.pop %v2349
    %v2351 = vsel %vm1050, %v2348, 0.0
    %v2352 = vrot.slane %v2351, 4
    %v2353 = vadd.f32 %v2351, %v2352
    %v2354 = vrot.slane %v2353, 2
    %v2355 = vadd.f32 %v2353, %v2354
    %v2356 = vrot.slane %v2355, 1
    %v2357 = vadd.f32 %v2355, %v2356
    %v2358 = vsel %vm1050, %v2350, 0.0
    %v2359 = vrot.slane %v2358, 4
    %v2360 = vadd.f32 %v2358, %v2359
    %v2361 = vrot.slane %v2360, 2
    %v2362 = vadd.f32 %v2360, %v2361
    %v2363 = vrot.slane %v2362, 1
    %v2364 = vadd.f32 %v2362, %v2363
    %v2365 = vrcp.pop %v2357
    %v2366 = vrcp.pop %v2364
    %v2367 = vmul.f32 %v2348, %v2365
    %v2368 = vmul.f32 %v2350, %v2366
    %v2369 = vmul.f32 %v2367, %v2138
    %v2370 = vmul.f32 %v2368, %v2275
    %v2371 = vsel %vm1050, %v2369, 0.0
    %v2372 = vrot.slane %v2371, 4
    %v2373 = vadd.f32 %v2371, %v2372
    %v2374 = vrot.slane %v2373, 2
    %v2375 = vadd.f32 %v2373, %v2374
    %v2376 = vrot.slane %v2375, 1
    %v2377 = vadd.f32 %v2375, %v2376
    %v2378 = vsel %vm1050, %v2370, 0.0
    %v2379 = vrot.slane %v2378, 4
    %v2380 = vadd.f32 %v2378, %v2379
    %v2381 = vrot.slane %v2380, 2
    %v2382 = vadd.f32 %v2380, %v2381
    %v2383 = vrot.slane %v2382, 1
    %v2384 = vadd.f32 %v2382, %v2383
    %v2385 = vld [vmem:[%s8] sm:$0xff]
    %v2386 = vld [vmem:[%s8 + $0x8] sm:$0xff]
    %v2387 = vld [vmem:[%s8 + $0x10] sm:$0xff]
    %v2388 = vld [vmem:[%s8 + $0x18] sm:$0xff]
    %v2389 = vld [vmem:[%s8 + $0x20] sm:$0xff]
    %v2390 = vld [vmem:[%s8 + $0x28] sm:$0xff]
    %v2391 = vld [vmem:[%s8 + $0x30] sm:$0xff]
    %v2392 = vld [vmem:[%s8 + $0x38] sm:$0xff]
    %v2393 = vld [vmem:[%s8 + $0x40] sm:$0xff]
    %v2394 = vld [vmem:[%s8 + $0x48] sm:$0xff]
    %v2395 = vld [vmem:[%s8 + $0x50] sm:$0xff]
    %v2396 = vld [vmem:[%s8 + $0x58] sm:$0xff]
    %v2397 = vld [vmem:[%s8 + $0x60] sm:$0xff]
    %v2398 = vld [vmem:[%s8 + $0x68] sm:$0xff]
    %v2399 = vld [vmem:[%s8 + $0x70] sm:$0xff]
    %v2400 = vld [vmem:[%s8 + $0x78] sm:$0xff]
    %v2401 = vld [vmem:[%s9] sm:$0x1]
    %v2403 = vperm.slane %v2401, 0
    %v2407 = vsel %vm2100, %v2384, %v2377
    %2409 = vmatpush.msra.mxu0 %v2400
    %2410 = vmatpush.msra.mxu0 %v2399
    %2411 = vmatpush.msra.mxu0 %v2398
    %2412 = vmatpush.msra.mxu0 %v2397
    %2413 = vmatpush.msra.mxu0 %v2396
    %2414 = vmatpush.msra.mxu0 %v2395
    %2415 = vmatpush.msra.mxu0 %v2394
    %2416 = vmatpush.msra.mxu0 %v2393
    %2417 = vmatpush.msra.mxu0 %v2392
    %2418 = vmatpush.msra.mxu0 %v2391
    %2419 = vmatpush.msra.mxu0 %v2390
    %2420 = vmatpush.msra.mxu0 %v2389
    %2421 = vmatpush.msra.mxu0 %v2388
    %2422 = vmatpush.msra.mxu0 %v2387
    %2423 = vmatpush.msra.mxu0 %v2386
    %2424 = vmatpush.msra.mxu0 %v2385
    %2425 = vmatmul.f32.gmra.mxu0 %v2407
    %v2426 = vpop.f32.mrf.mxu0
    %v2427 = vadd.f32 %v2403, %v2426
    %2428 = vdwg.mxu0
    %2429 = vst.msk [vmem:[#allocation4] sm:$0x3] %vm81, %v2427
    // Predicated region
    $region54: #{_lambda_.1} parent=1 // pred_check
      _
    $region55: #{_lambda_.1} parent=1 // pred_check_branch
      %2431 = sbr.rel (0) target = $region57
    $region56: #{_lambda_.1} parent=1 // pred_region
      %2433 = vsyncadd [#allocation3], 0
      %s2435 = sshll.u32 [#allocation2], 4
      %s2436 = int_to_ptr.vmem [resolvable:$true] %s2435
      %s2437 = sshll.u32 %s13, 4
      %s2438 = int_to_ptr.hbm [resolvable:$true] %s2437
      %2440 = dma.vmem_to_hbm [thread:$0]  %s2436, 32, %s2438, [#allocation3]
    $region57: #{_lambda_.1} parent=1 // pred_fallthru
      _
    // Predicated region
    $region58: #{_lambda_.1} parent=1 // pred_check
      _
    $region59: #{_lambda_.1} parent=1 // pred_check_branch
      %2442 = sbr.rel (0) target = $region61
    $region60: #{_lambda_.1} parent=1 // pred_region
      %2444 = vsyncadd [#allocation5], 0
      %s2446 = sshll.u32 [#allocation4], 4
      %s2447 = int_to_ptr.vmem [resolvable:$true] %s2446
      %s2448 = sshll.u32 %s14, 4
      %s2449 = int_to_ptr.hbm [resolvable:$true] %s2448
      %2451 = dma.vmem_to_hbm [thread:$0]  %s2447, 32, %s2449, [#allocation5]
    $region61: #{_lambda_.1} parent=1 // pred_fallthru
      _
    // Predicated region
    $region62: #{_lambda_.1} parent=1 // pred_check
      _
    $region63: #{_lambda_.1} parent=1 // pred_check_branch
      %2453 = sbr.rel (0) target = $region65
    $region64: #{_lambda_.1} parent=1 // pred_region
      %2455 = dma.done [#allocation3], 32
    $region65: #{_lambda_.1} parent=1 // pred_fallthru
      _
    // Predicated region
    $region66: #{_lambda_.1} parent=1 // pred_check
      _
    $region67: #{_lambda_.1} parent=1 // pred_check_branch
      %2457 = sbr.rel (0) target = $region69
    $region68: #{_lambda_.1} parent=1 // pred_region
      %2459 = dma.done [#allocation5], 32
    $region69: #{_lambda_.1} parent=1 // pred_fallthru
      _
    %2460 = vsyncpa [#allocation3], 1
    %2461 = vsyncpa [#allocation5], 1

</llo_original>
